<compile_context>
chip_gen: v7x
topology: tpu7x:2x2x1
jax: 0.10.0
libtpu: 0.0.40
codegen_flags: <defaults>
</compile_context>

<pallas_src>
import functools

import jax
import jax.numpy as jnp
from jax.experimental import pallas as pl
from jax.experimental.pallas import tpu as pltpu

# layer sizes of the autoencoder (encoder then decoder)
DIMS = [28 * 28, 128, 64, 12, 3, 12, 64, 128, 28 * 28]
D_IN = 28 * 28     # 784


def _round_up(x, m):
    return (x + m - 1) // m * m


def _default_tiling():
    """Pick (batch tile, vmem limit) from the local chip's VMEM capacity.

    v7x has 64 MiB VMEM per TensorCore -> TB=2048 / 48 MiB keeps double-buffering headroom.
    v5e / v6e have 128 MiB            -> TB=4096 / 96 MiB amortizes the ~0.35 us/step overhead.
    """
    tb, vmem_limit = 2048, 48 * 1024 * 1024            # safe on every generation (incl. v7x)
    try:
        if pltpu.get_tpu_info().vmem_capacity_bytes >= 100 * 1024 * 1024:
            tb, vmem_limit = 4096, 96 * 1024 * 1024    # v5e / v6e: plenty of VMEM
    except Exception:
        pass
    return tb, vmem_limit


def _autoencoder_kernel(x_ref,
                        w1, b1, w2, b2, w3, b3,
                        w45, b45, w6, b6, w7, b7, w8, b8,
                        out_ref):
    """One batch tile of the autoencoder forward pass (weights are VMEM-resident)."""

    def linear(h_bf16, w_ref, b_ref):
        # bf16 MXU inputs, f32 accumulation, f32 bias add.
        return jnp.dot(h_bf16, w_ref[...],
                       preferred_element_type=jnp.float32) + b_ref[...]

    def relu_bf16(h_f32):
        # ReLU in f32 (fast VPU path on all generations); bf16 only for the next MXU pass.
        return jnp.maximum(h_f32, 0.0).astype(jnp.bfloat16)

    h = x_ref[...].astype(jnp.bfloat16)   # f32 -> bf16 cast fused in-kernel (no wrapper HBM pass)
    h = relu_bf16(linear(h, w1, b1))      # 784 -> 128
    h = relu_bf16(linear(h, w2, b2))      # 128 -> 64
    h = relu_bf16(linear(h, w3, b3))      # 64  -> 12
    h = relu_bf16(linear(h, w45, b45))    # 12  -> 12  (fused L4∘L5; ReLU belongs to decoder L5)
    h = relu_bf16(linear(h, w6, b6))      # 12  -> 64
    h = relu_bf16(linear(h, w7, b7))      # 64  -> 128
    h = linear(h, w8, b8)                 # 128 -> 784 (f32)
    # Sigmoid kept in f32: v5e has no bf16 EUP; on v6e/v7x this pass is hidden under the DMA.
    out_ref[...] = jax.nn.sigmoid(h).astype(out_ref.dtype)


def prepare_params(params):
    """One-time weight prep, hoisted out of the per-call path.

    * Fuses L4 (12->3) and L5 (3->12): the PyTorch module applies NO activation between the
      encoder's last Linear and the decoder's first Linear, so
      (x @ W4 + b4) @ W5 + b5 == x @ (W4 @ W5) + (b4 @ W5 + b5) exactly.
    * Casts weights to bf16 (MXU inputs); biases stay f32 (added to the f32 accumulator).
    """
    (w1, b1), (w2, b2), (w3, b3), (w4, b4), (w5, b5), (w6, b6), (w7, b7), (w8, b8) = params
    w45 = w4 @ w5                  # (12, 12) f32
    b45 = b4 @ w5 + b5             # (1, 12)  f32
    flat = []
    for w, b in zip((w1, w2, w3, w45, w6, w7, w8),
                    (b1, b2, b3, b45, b6, b7, b8)):
        flat += [w.astype(jnp.bfloat16), b.astype(jnp.float32)]
    return tuple(flat)


@functools.partial(jax.jit,
                   static_argnames=("tb", "vmem_limit_bytes", "out_dtype"))
def autoencoder_forward(x, prepared, *, tb=2048,
                        vmem_limit_bytes=48 * 1024 * 1024,
                        out_dtype=jnp.bfloat16):
    """x: (B, 784) float32; prepared: output of prepare_params().

    Returns the (B, 784) reconstruction in `out_dtype` (bf16 by default; pass jnp.float32
    to match the PyTorch module's output dtype at the cost of 2x output HBM bytes).
    """
    B, D = x.shape
    assert D == D_IN, D
    assert len(prepared) == 14

    # Batch tile: multiple of 8 sublanes, capped so the grid has >=2 steps whenever the batch
    # allows it (so dimension_semantics=("parallel",) feeds both v7x TensorCores).
    tb_eff = _round_up(min(tb, _round_up(pl.cdiv(B, 2), 8)), 8)
    if tb_eff >= B:
        tb_eff = B                      # single full-batch block (full-dim block is always legal)
    n_steps = pl.cdiv(B, tb_eff)        # ragged last block handled by Pallas (masked writeback)

    def resident(a):
        # Same block index every grid step -> DMA'd once, stays VMEM-resident.
        return pl.BlockSpec(a.shape, lambda i: (0, 0))

    in_specs = ([pl.BlockSpec((tb_eff, D_IN), lambda i: (i, 0))]
                + [resident(a) for a in prepared])
    out_spec = pl.BlockSpec((tb_eff, D_IN), lambda i: (i, 0))

    return pl.pallas_call(
        _autoencoder_kernel,
        out_shape=jax.ShapeDtypeStruct((B, D_IN), out_dtype),
        grid=(n_steps,),
        in_specs=in_specs,
        out_specs=out_spec,
        compiler_params=pltpu.CompilerParams(
            dimension_semantics=("parallel",),      # batch axis sharded across TCs on v7x
            vmem_limit_bytes=vmem_limit_bytes),
    )(x, *prepared)


def init_params(key):
    """Deterministic init mimicking nn.Linear default: U(-1/sqrt(fan_in), 1/sqrt(fan_in))."""
    params = []
    for i in range(len(DIMS) - 1):
        fan_in, fan_out = DIMS[i], DIMS[i + 1]
        key, kw, kb = jax.random.split(key, 3)
        bound = 1.0 / jnp.sqrt(jnp.asarray(fan_in, jnp.float32))
        w = jax.random.uniform(kw, (fan_in, fan_out), jnp.float32, -bound, bound)
        b = jax.random.uniform(kb, (1, fan_out), jnp.float32, -bound, bound)
        params.append((w, b))
    return params


_RELU_AFTER = (0, 1, 2, 4, 5, 6)   # ReLU after all layers except L4 (code) and L8 (sigmoid)


def reference_forward(x, params):
    """Pure-JAX f32 reference (module semantics)."""
    h = x
    for i, (w, b) in enumerate(params):
        h = h @ w + b
        if i in _RELU_AFTER:
            h = jnp.maximum(h, 0.0)
    return jax.nn.sigmoid(h)


def reference_forward_bf16(x, params):
    """Reference mimicking the kernel's numerics: bf16 MXU inputs, f32 accumulation."""
    h = x.astype(jnp.float32)
    for i, (w, b) in enumerate(params):
        h = jnp.dot(h.astype(jnp.bfloat16), w.astype(jnp.bfloat16),
                    preferred_element_type=jnp.float32) + b
        if i in _RELU_AFTER:
            h = jnp.maximum(h, 0.0)
    return jax.nn.sigmoid(h)


if __name__ == "__main__":
    key = jax.random.PRNGKey(0)
    key, kx = jax.random.split(key)

    B = 16
    x = jax.random.uniform(kx, (B, D_IN), jnp.float32)   # "flattened MNIST image"-like input
    params = init_params(key)
    prepared = prepare_params(params)                     # one-time prep, hoisted out of the call

    tb, vmem_limit = _default_tiling()
    # At B=16 the >=2-grid-steps rule caps the tile at 8 rows -> a 2-step batch grid,
    # exercising the pipelined / resident-weight path regardless of tb.
    out = autoencoder_forward(x, prepared, tb=tb, vmem_limit_bytes=vmem_limit)
    out = jax.block_until_ready(out)

    assert out.shape == (B, D_IN), out.shape
    out_f32 = out.astype(jnp.float32)

    ref_bf16 = reference_forward_bf16(x, params)
    ref_f32 = reference_forward(x, params)

    err_vs_bf16 = float(jnp.max(jnp.abs(out_f32 - ref_bf16)))
    err_vs_f32 = float(jnp.max(jnp.abs(out_f32 - ref_f32)))
    assert err_vs_bf16 < 2e-2, err_vs_bf16   # bf16-matched reference: tight-ish check
    assert err_vs_f32 < 5e-2, err_vs_f32     # pure-f32 reference: sanity check

    print("KERNEL_OK")
</pallas_src>

<mosaic_0001>
module attributes {stable_mosaic.version = 11 : i64} {
  func.func @_autoencoder_kernel(%arg0: i32, %arg1: memref<8x784xf32, #tpu.memory_space<vmem>>, %arg2: memref<784x128xbf16, #tpu.memory_space<vmem>>, %arg3: memref<1x128xf32, #tpu.memory_space<vmem>>, %arg4: memref<128x64xbf16, #tpu.memory_space<vmem>>, %arg5: memref<1x64xf32, #tpu.memory_space<vmem>>, %arg6: memref<64x12xbf16, #tpu.memory_space<vmem>>, %arg7: memref<1x12xf32, #tpu.memory_space<vmem>>, %arg8: memref<12x12xbf16, #tpu.memory_space<vmem>>, %arg9: memref<1x12xf32, #tpu.memory_space<vmem>>, %arg10: memref<12x64xbf16, #tpu.memory_space<vmem>>, %arg11: memref<1x64xf32, #tpu.memory_space<vmem>>, %arg12: memref<64x128xbf16, #tpu.memory_space<vmem>>, %arg13: memref<1x128xf32, #tpu.memory_space<vmem>>, %arg14: memref<128x784xbf16, #tpu.memory_space<vmem>>, %arg15: memref<1x784xf32, #tpu.memory_space<vmem>>, %arg16: memref<8x784xbf16, #tpu.memory_space<vmem>>) attributes {dimension_semantics = [#tpu.dimension_semantics<parallel>], iteration_bounds = array<i64: 2>, scalar_prefetch = 0 : i64, scratch_operands = 0 : i64, tpu.core_type = #tpu.core_type<tc>, window_params = [{transform_indices = @transform_0, window_bounds = array<i64: 8, 784>}, {pipeline_mode = #tpu.pipeline_mode<synchronous>, transform_indices = @transform_1, window_bounds = array<i64: 784, 128>}, {pipeline_mode = #tpu.pipeline_mode<synchronous>, transform_indices = @transform_2, window_bounds = array<i64: 1, 128>}, {pipeline_mode = #tpu.pipeline_mode<synchronous>, transform_indices = @transform_3, window_bounds = array<i64: 128, 64>}, {pipeline_mode = #tpu.pipeline_mode<synchronous>, transform_indices = @transform_4, window_bounds = array<i64: 1, 64>}, {pipeline_mode = #tpu.pipeline_mode<synchronous>, transform_indices = @transform_5, window_bounds = array<i64: 64, 12>}, {pipeline_mode = #tpu.pipeline_mode<synchronous>, transform_indices = @transform_6, window_bounds = array<i64: 1, 12>}, {pipeline_mode = #tpu.pipeline_mode<synchronous>, transform_indices = @transform_7, window_bounds = array<i64: 12, 12>}, {pipeline_mode = #tpu.pipeline_mode<synchronous>, transform_indices = @transform_8, window_bounds = array<i64: 1, 12>}, {pipeline_mode = #tpu.pipeline_mode<synchronous>, transform_indices = @transform_9, window_bounds = array<i64: 12, 64>}, {pipeline_mode = #tpu.pipeline_mode<synchronous>, transform_indices = @transform_10, window_bounds = array<i64: 1, 64>}, {pipeline_mode = #tpu.pipeline_mode<synchronous>, transform_indices = @transform_11, window_bounds = array<i64: 64, 128>}, {pipeline_mode = #tpu.pipeline_mode<synchronous>, transform_indices = @transform_12, window_bounds = array<i64: 1, 128>}, {pipeline_mode = #tpu.pipeline_mode<synchronous>, transform_indices = @transform_13, window_bounds = array<i64: 128, 784>}, {pipeline_mode = #tpu.pipeline_mode<synchronous>, transform_indices = @transform_14, window_bounds = array<i64: 1, 784>}, {transform_indices = @transform_15, window_bounds = array<i64: 8, 784>}]} {
    %c0 = arith.constant 0 : index
    %c0_0 = arith.constant 0 : index
    %0 = vector.load %arg1[%c0, %c0_0] : memref<8x784xf32, #tpu.memory_space<vmem>>, vector<8x784xf32>
    %1 = arith.truncf %0 : vector<8x784xf32> to vector<8x784xbf16>
    %c0_1 = arith.constant 0 : index
    %c0_2 = arith.constant 0 : index
    %2 = vector.load %arg2[%c0_1, %c0_2] : memref<784x128xbf16, #tpu.memory_space<vmem>>, vector<784x128xbf16>
    %cst = arith.constant dense<0.000000e+00> : vector<8x128xf32>
    %3 = tpu.matmul %1, %2, %cst {dimension_numbers = #tpu.dot_dimension_numbers<[1], [0], [0], [1], [0, 0, 1, 1], [], []>} : vector<8x784xbf16>, vector<784x128xbf16>, vector<8x128xf32> -> vector<8x128xf32>
    %c0_3 = arith.constant 0 : index
    %c0_4 = arith.constant 0 : index
    %4 = vector.load %arg3[%c0_3, %c0_4] : memref<1x128xf32, #tpu.memory_space<vmem>>, vector<1x128xf32>
    %5 = vector.broadcast %4 : vector<1x128xf32> to vector<8x128xf32>
    %6 = arith.addf %3, %5 : vector<8x128xf32>
    %cst_5 = arith.constant 0.000000e+00 : f32
    %7 = vector.broadcast %cst_5 : f32 to vector<8x128xf32>
    %8 = arith.maximumf %6, %7 : vector<8x128xf32>
    %9 = arith.truncf %8 : vector<8x128xf32> to vector<8x128xbf16>
    %c0_6 = arith.constant 0 : index
    %c0_7 = arith.constant 0 : index
    %10 = vector.load %arg4[%c0_6, %c0_7] : memref<128x64xbf16, #tpu.memory_space<vmem>>, vector<128x64xbf16>
    %cst_8 = arith.constant dense<0.000000e+00> : vector<8x64xf32>
    %11 = tpu.matmul %9, %10, %cst_8 {dimension_numbers = #tpu.dot_dimension_numbers<[1], [0], [0], [1], [0, 0, 1, 1], [], []>} : vector<8x128xbf16>, vector<128x64xbf16>, vector<8x64xf32> -> vector<8x64xf32>
    %c0_9 = arith.constant 0 : index
    %c0_10 = arith.constant 0 : index
    %12 = vector.load %arg5[%c0_9, %c0_10] : memref<1x64xf32, #tpu.memory_space<vmem>>, vector<1x64xf32>
    %13 = vector.broadcast %12 : vector<1x64xf32> to vector<8x64xf32>
    %14 = arith.addf %11, %13 : vector<8x64xf32>
    %cst_11 = arith.constant 0.000000e+00 : f32
    %15 = vector.broadcast %cst_11 : f32 to vector<8x64xf32>
    %16 = arith.maximumf %14, %15 : vector<8x64xf32>
    %17 = arith.truncf %16 : vector<8x64xf32> to vector<8x64xbf16>
    %c0_12 = arith.constant 0 : index
    %c0_13 = arith.constant 0 : index
    %18 = vector.load %arg6[%c0_12, %c0_13] : memref<64x12xbf16, #tpu.memory_space<vmem>>, vector<64x12xbf16>
    %cst_14 = arith.constant dense<0.000000e+00> : vector<8x12xf32>
    %19 = tpu.matmul %17, %18, %cst_14 {dimension_numbers = #tpu.dot_dimension_numbers<[1], [0], [0], [1], [0, 0, 1, 1], [], []>} : vector<8x64xbf16>, vector<64x12xbf16>, vector<8x12xf32> -> vector<8x12xf32>
    %c0_15 = arith.constant 0 : index
    %c0_16 = arith.constant 0 : index
    %20 = vector.load %arg7[%c0_15, %c0_16] : memref<1x12xf32, #tpu.memory_space<vmem>>, vector<1x12xf32>
    %21 = vector.broadcast %20 : vector<1x12xf32> to vector<8x12xf32>
    %22 = arith.addf %19, %21 : vector<8x12xf32>
    %cst_17 = arith.constant 0.000000e+00 : f32
    %23 = vector.broadcast %cst_17 : f32 to vector<8x12xf32>
    %24 = arith.maximumf %22, %23 : vector<8x12xf32>
    %25 = arith.truncf %24 : vector<8x12xf32> to vector<8x12xbf16>
    %c0_18 = arith.constant 0 : index
    %c0_19 = arith.constant 0 : index
    %26 = vector.load %arg8[%c0_18, %c0_19] : memref<12x12xbf16, #tpu.memory_space<vmem>>, vector<12x12xbf16>
    %cst_20 = arith.constant dense<0.000000e+00> : vector<8x12xf32>
    %27 = tpu.matmul %25, %26, %cst_20 {dimension_numbers = #tpu.dot_dimension_numbers<[1], [0], [0], [1], [0, 0, 1, 1], [], []>} : vector<8x12xbf16>, vector<12x12xbf16>, vector<8x12xf32> -> vector<8x12xf32>
    %c0_21 = arith.constant 0 : index
    %c0_22 = arith.constant 0 : index
    %28 = vector.load %arg9[%c0_21, %c0_22] : memref<1x12xf32, #tpu.memory_space<vmem>>, vector<1x12xf32>
    %29 = vector.broadcast %28 : vector<1x12xf32> to vector<8x12xf32>
    %30 = arith.addf %27, %29 : vector<8x12xf32>
    %cst_23 = arith.constant 0.000000e+00 : f32
    %31 = vector.broadcast %cst_23 : f32 to vector<8x12xf32>
    %32 = arith.maximumf %30, %31 : vector<8x12xf32>
    %33 = arith.truncf %32 : vector<8x12xf32> to vector<8x12xbf16>
    %c0_24 = arith.constant 0 : index
    %c0_25 = arith.constant 0 : index
    %34 = vector.load %arg10[%c0_24, %c0_25] : memref<12x64xbf16, #tpu.memory_space<vmem>>, vector<12x64xbf16>
    %cst_26 = arith.constant dense<0.000000e+00> : vector<8x64xf32>
    %35 = tpu.matmul %33, %34, %cst_26 {dimension_numbers = #tpu.dot_dimension_numbers<[1], [0], [0], [1], [0, 0, 1, 1], [], []>} : vector<8x12xbf16>, vector<12x64xbf16>, vector<8x64xf32> -> vector<8x64xf32>
    %c0_27 = arith.constant 0 : index
    %c0_28 = arith.constant 0 : index
    %36 = vector.load %arg11[%c0_27, %c0_28] : memref<1x64xf32, #tpu.memory_space<vmem>>, vector<1x64xf32>
    %37 = vector.broadcast %36 : vector<1x64xf32> to vector<8x64xf32>
    %38 = arith.addf %35, %37 : vector<8x64xf32>
    %cst_29 = arith.constant 0.000000e+00 : f32
    %39 = vector.broadcast %cst_29 : f32 to vector<8x64xf32>
    %40 = arith.maximumf %38, %39 : vector<8x64xf32>
    %41 = arith.truncf %40 : vector<8x64xf32> to vector<8x64xbf16>
    %c0_30 = arith.constant 0 : index
    %c0_31 = arith.constant 0 : index
    %42 = vector.load %arg12[%c0_30, %c0_31] : memref<64x128xbf16, #tpu.memory_space<vmem>>, vector<64x128xbf16>
    %cst_32 = arith.constant dense<0.000000e+00> : vector<8x128xf32>
    %43 = tpu.matmul %41, %42, %cst_32 {dimension_numbers = #tpu.dot_dimension_numbers<[1], [0], [0], [1], [0, 0, 1, 1], [], []>} : vector<8x64xbf16>, vector<64x128xbf16>, vector<8x128xf32> -> vector<8x128xf32>
    %c0_33 = arith.constant 0 : index
    %c0_34 = arith.constant 0 : index
    %44 = vector.load %arg13[%c0_33, %c0_34] : memref<1x128xf32, #tpu.memory_space<vmem>>, vector<1x128xf32>
    %45 = vector.broadcast %44 : vector<1x128xf32> to vector<8x128xf32>
    %46 = arith.addf %43, %45 : vector<8x128xf32>
    %cst_35 = arith.constant 0.000000e+00 : f32
    %47 = vector.broadcast %cst_35 : f32 to vector<8x128xf32>
    %48 = arith.maximumf %46, %47 : vector<8x128xf32>
    %49 = arith.truncf %48 : vector<8x128xf32> to vector<8x128xbf16>
    %c0_36 = arith.constant 0 : index
    %c0_37 = arith.constant 0 : index
    %50 = vector.load %arg14[%c0_36, %c0_37] : memref<128x784xbf16, #tpu.memory_space<vmem>>, vector<128x784xbf16>
    %cst_38 = arith.constant dense<0.000000e+00> : vector<8x784xf32>
    %51 = tpu.matmul %49, %50, %cst_38 {dimension_numbers = #tpu.dot_dimension_numbers<[1], [0], [0], [1], [0, 0, 1, 1], [], []>} : vector<8x128xbf16>, vector<128x784xbf16>, vector<8x784xf32> -> vector<8x784xf32>
    %c0_39 = arith.constant 0 : index
    %c0_40 = arith.constant 0 : index
    %52 = vector.load %arg15[%c0_39, %c0_40] : memref<1x784xf32, #tpu.memory_space<vmem>>, vector<1x784xf32>
    %53 = vector.broadcast %52 : vector<1x784xf32> to vector<8x784xf32>
    %54 = arith.addf %51, %53 : vector<8x784xf32>
    %55 = arith.negf %54 : vector<8x784xf32>
    %56 = math.exp %55 : vector<8x784xf32>
    %cst_41 = arith.constant 1.000000e+00 : f32
    %57 = vector.broadcast %cst_41 : f32 to vector<8x784xf32>
    %58 = arith.addf %57, %56 : vector<8x784xf32>
    %59 = arith.divf %57, %58 : vector<8x784xf32>
    %60 = arith.truncf %59 : vector<8x784xf32> to vector<8x784xbf16>
    %c0_42 = arith.constant 0 : index
    %c0_43 = arith.constant 0 : index
    %61 = vector.load %arg16[%c0_42, %c0_43] : memref<8x784xbf16, #tpu.memory_space<vmem>>, vector<8x784xbf16>
    tpu.vector_store %arg16[%c0_42, %c0_43], %60 {strides = array<i32>} : memref<8x784xbf16, #tpu.memory_space<vmem>>, vector<8x784xbf16>,
    return
  }
  func.func @transform_0(%arg0: i32) -> (i32, i32) {
    %c0_i32 = arith.constant 0 : i32
    %c0_i32_0 = arith.constant 0 : i32
    return %arg0, %c0_i32 : i32, i32
  }
  func.func @transform_1(%arg0: i32) -> (i32, i32) {
    %c0_i32 = arith.constant 0 : i32
    %c0_i32_0 = arith.constant 0 : i32
    %c0_i32_1 = arith.constant 0 : i32
    return %c0_i32, %c0_i32_0 : i32, i32
  }
  func.func @transform_2(%arg0: i32) -> (i32, i32) {
    %c0_i32 = arith.constant 0 : i32
    %c0_i32_0 = arith.constant 0 : i32
    %c0_i32_1 = arith.constant 0 : i32
    return %c0_i32, %c0_i32_0 : i32, i32
  }
  func.func @transform_3(%arg0: i32) -> (i32, i32) {
    %c0_i32 = arith.constant 0 : i32
    %c0_i32_0 = arith.constant 0 : i32
    %c0_i32_1 = arith.constant 0 : i32
    return %c0_i32, %c0_i32_0 : i32, i32
  }
  func.func @transform_4(%arg0: i32) -> (i32, i32) {
    %c0_i32 = arith.constant 0 : i32
    %c0_i32_0 = arith.constant 0 : i32
    %c0_i32_1 = arith.constant 0 : i32
    return %c0_i32, %c0_i32_0 : i32, i32
  }
  func.func @transform_5(%arg0: i32) -> (i32, i32) {
    %c0_i32 = arith.constant 0 : i32
    %c0_i32_0 = arith.constant 0 : i32
    %c0_i32_1 = arith.constant 0 : i32
    return %c0_i32, %c0_i32_0 : i32, i32
  }
  func.func @transform_6(%arg0: i32) -> (i32, i32) {
    %c0_i32 = arith.constant 0 : i32
    %c0_i32_0 = arith.constant 0 : i32
    %c0_i32_1 = arith.constant 0 : i32
    return %c0_i32, %c0_i32_0 : i32, i32
  }
  func.func @transform_7(%arg0: i32) -> (i32, i32) {
    %c0_i32 = arith.constant 0 : i32
    %c0_i32_0 = arith.constant 0 : i32
    %c0_i32_1 = arith.constant 0 : i32
    return %c0_i32, %c0_i32_0 : i32, i32
  }
  func.func @transform_8(%arg0: i32) -> (i32, i32) {
    %c0_i32 = arith.constant 0 : i32
    %c0_i32_0 = arith.constant 0 : i32
    %c0_i32_1 = arith.constant 0 : i32
    return %c0_i32, %c0_i32_0 : i32, i32
  }
  func.func @transform_9(%arg0: i32) -> (i32, i32) {
    %c0_i32 = arith.constant 0 : i32
    %c0_i32_0 = arith.constant 0 : i32
    %c0_i32_1 = arith.constant 0 : i32
    return %c0_i32, %c0_i32_0 : i32, i32
  }
  func.func @transform_10(%arg0: i32) -> (i32, i32) {
    %c0_i32 = arith.constant 0 : i32
    %c0_i32_0 = arith.constant 0 : i32
    %c0_i32_1 = arith.constant 0 : i32
    return %c0_i32, %c0_i32_0 : i32, i32
  }
  func.func @transform_11(%arg0: i32) -> (i32, i32) {
    %c0_i32 = arith.constant 0 : i32
    %c0_i32_0 = arith.constant 0 : i32
    %c0_i32_1 = arith.constant 0 : i32
    return %c0_i32, %c0_i32_0 : i32, i32
  }
  func.func @transform_12(%arg0: i32) -> (i32, i32) {
    %c0_i32 = arith.constant 0 : i32
    %c0_i32_0 = arith.constant 0 : i32
    %c0_i32_1 = arith.constant 0 : i32
    return %c0_i32, %c0_i32_0 : i32, i32
  }
  func.func @transform_13(%arg0: i32) -> (i32, i32) {
    %c0_i32 = arith.constant 0 : i32
    %c0_i32_0 = arith.constant 0 : i32
    %c0_i32_1 = arith.constant 0 : i32
    return %c0_i32, %c0_i32_0 : i32, i32
  }
  func.func @transform_14(%arg0: i32) -> (i32, i32) {
    %c0_i32 = arith.constant 0 : i32
    %c0_i32_0 = arith.constant 0 : i32
    %c0_i32_1 = arith.constant 0 : i32
    return %c0_i32, %c0_i32_0 : i32, i32
  }
  func.func @transform_15(%arg0: i32) -> (i32, i32) {
    %c0_i32 = arith.constant 0 : i32
    %c0_i32_0 = arith.constant 0 : i32
    return %arg0, %c0_i32 : i32, i32
  }
}

</mosaic_0001>

<llo_original>
// kernel: autoencoder_forward.1
$region0: #{autoencoder_forward.1}
  #allocation0 [shape = 'u32[]', space=smem, size = 0x4, offset = 0x4, fixed_abs, tag = 'smem constant byte address 0x4 - core index']
  #allocation1 [shape = 'u32[144,128]{1,0:T(1,128)}', space=vmem, size = 0x12000, scoped, tag = 'internal scratch']
  %s0 = inlined_call_operand.vmem [shape: f32[16,784], index: 0, kind: input, shape index: {}]
  %s1 = inlined_call_operand.vmem [shape: bf16[784,128], index: 1, kind: input, shape index: {}]
  %s2 = inlined_call_operand.vmem [shape: f32[1,128], index: 2, kind: input, shape index: {}]
  %s3 = inlined_call_operand.vmem [shape: bf16[128,64], index: 3, kind: input, shape index: {}]
  %s4 = inlined_call_operand.vmem [shape: f32[1,64], index: 4, kind: input, shape index: {}]
  %s5 = inlined_call_operand.vmem [shape: bf16[64,12], index: 5, kind: input, shape index: {}]
  %s6 = inlined_call_operand.vmem [shape: f32[1,12], index: 6, kind: input, shape index: {}]
  %s7 = inlined_call_operand.vmem [shape: bf16[12,12], index: 7, kind: input, shape index: {}]
  %s8 = inlined_call_operand.vmem [shape: f32[1,12], index: 8, kind: input, shape index: {}]
  %s9 = inlined_call_operand.vmem [shape: bf16[12,64], index: 9, kind: input, shape index: {}]
  %s10 = inlined_call_operand.vmem [shape: f32[1,64], index: 10, kind: input, shape index: {}]
  %s11 = inlined_call_operand.vmem [shape: bf16[64,128], index: 11, kind: input, shape index: {}]
  %s12 = inlined_call_operand.vmem [shape: f32[1,128], index: 12, kind: input, shape index: {}]
  %s13 = inlined_call_operand.vmem [shape: bf16[128,784], index: 13, kind: input, shape index: {}]
  %s14 = inlined_call_operand.vmem [shape: f32[1,784], index: 14, kind: input, shape index: {}]
  %s15 = inlined_call_operand.hbm [shape: bf16[16,784], index: 15, kind: output, shape index: {}]
  %s16 = sld [smem:[#allocation0]]
  $region93: #{autoencoder_forward.1} parent=0
    _
  %s18 = ssub.s32 1, %s16
  %s19 = scalar_select 0, %s18, %s16
  $region1: #{autoencoder_forward.1} parent=0
    #allocation2 [shape = 'u8[28672]{0}', space=vmem, size = 0x7000, scoped, tag = 'output window, operand 0']
    #allocation3 [shape = 's32[2]{0}', space=sflag, size = 0x8, scoped, tag = 'scoped memory for autoencoder_forward.1']
    %20 = vsyncpa [#allocation3], 0
    %s21 = scalar_lea.sflag [#allocation3], 1
    %22 = vsyncpa %s21, 0
    loop: start=0, step=1, limit=4
    $region2: #{autoencoder_forward.1} parent=1 // loop_pre_header
      _
    $region3: #{autoencoder_forward.1} parent=1 // loop_header
      %s24 = sphi 0, %s28
      %p25 = scmp.ge.s32.totalorder %s24, 4
      %s34 = sphi 0, %s36
      %s37 = sphi 0, %s34
      %s38 = sphi 0, %s37
      %s54 = sphi 0, %s38
      %s58 = sphi 0, %s58
      %s60 = sphi 0, %s58
      %s61 = sphi 0, %s60
      %s75 = sphi 0, %s61
      %s79 = sphi 0, %s79
      %s81 = sphi 0, %s79
      %s82 = sphi 0, %s81
      %s96 = sphi 0, %s82
      %s100 = sphi 0, %s100
      %s102 = sphi 0, %s100
      %s103 = sphi 0, %s102
      %s117 = sphi 0, %s103
      %s121 = sphi 0, %s121
      %s123 = sphi 0, %s121
      %s124 = sphi 0, %s123
      %s138 = sphi 0, %s124
      %s142 = sphi 0, %s142
      %s144 = sphi 0, %s142
      %s145 = sphi 0, %s144
      %s159 = sphi 0, %s145
      %s163 = sphi 0, %s163
      %s165 = sphi 0, %s163
      %s166 = sphi 0, %s165
      %s180 = sphi 0, %s166
      %s184 = sphi 0, %s184
      %s186 = sphi 0, %s184
      %s187 = sphi 0, %s186
      %s201 = sphi 0, %s187
      %s205 = sphi 0, %s205
      %s207 = sphi 0, %s205
      %s208 = sphi 0, %s207
      %s222 = sphi 0, %s208
      %s226 = sphi 0, %s226
      %s228 = sphi 0, %s226
      %s229 = sphi 0, %s228
      %s243 = sphi 0, %s229
      %s247 = sphi 0, %s247
      %s249 = sphi 0, %s247
      %s250 = sphi 0, %s249
      %s264 = sphi 0, %s250
      %s268 = sphi 0, %s268
      %s270 = sphi 0, %s268
      %s271 = sphi 0, %s270
      %s285 = sphi 0, %s271
      %s289 = sphi 0, %s289
      %s291 = sphi 0, %s289
      %s292 = sphi 0, %s291
      %s306 = sphi 0, %s292
      %s310 = sphi 0, %s310
      %s312 = sphi 0, %s310
      %s313 = sphi 0, %s312
      %s327 = sphi 0, %s313
      %s331 = sphi 0, %s331
      %s333 = sphi 0, %s331
      %s334 = sphi 0, %s333
      %s348 = sphi 0, %s334
      %s354 = sphi 0, %s356
      %s357 = sphi 0, %s354
      %s358 = sphi 0, %s357
      %s374 = sphi 0, %s358
    $region4: #{autoencoder_forward.1} parent=1 // loop_header_branch
      %27 = sbr.rel (%p25) target = $region8
    $region5: #{autoencoder_forward.1} parent=1 // loop_body
      %s29 = ssub.s32 %s24, 1
      %s30 = ssub.s32 %s24, 2
      %s31 = sadd.s32 %s24, 1
      %s32 = ssub.s32 %s24, %s31
      %p33 = scmp.eq.s32.totalorder %s32, 0
      %s35 = sadd.s32 %s34, 1
      %s36 = scalar_select %p33, %s34, %s35
      %p39 = pneg %p33
      %p40 = scmp.eq.s32.totalorder %s24, 1
      %p41 = por %p39, %p40
      %p42 = scmp.ne.s32.totalorder %s34, %s37
      %p43 = scmp.eq.s32.totalorder %s24, 0
      %p44 = por %p42, %p43
      %p45 = scmp.ne.s32.totalorder %s34, %s37
      %p46 = scmp.eq.s32.totalorder %s29, 1
      %p47 = por %p45, %p46
      %p48 = scmp.ne.s32.totalorder %s37, %s38
      %p49 = scmp.eq.s32.totalorder %s29, 0
      %p50 = por %p48, %p49
      %p51 = scmp.ne.s32.totalorder %s37, %s38
      %p52 = scmp.eq.s32.totalorder %s30, 1
      %p53 = por %p51, %p52
      %p55 = scmp.ne.s32.totalorder %s38, %s54
      %p56 = scmp.eq.s32.totalorder %s30, 0
      %p57 = por %p55, %p56
      %s59 = sadd.s32 %s58, 1
      %p62 = scmp.eq.s32.totalorder %s24, 1
      %p63 = scmp.ne.s32.totalorder %s58, %s60
      %p64 = scmp.eq.s32.totalorder %s24, 0
      %p65 = por %p63, %p64
      %p66 = scmp.ne.s32.totalorder %s58, %s60
      %p67 = scmp.eq.s32.totalorder %s29, 1
      %p68 = por %p66, %p67
      %p69 = scmp.ne.s32.totalorder %s60, %s61
      %p70 = scmp.eq.s32.totalorder %s29, 0
      %p71 = por %p69, %p70
      %p72 = scmp.ne.s32.totalorder %s60, %s61
      %p73 = scmp.eq.s32.totalorder %s30, 1
      %p74 = por %p72, %p73
      %p76 = scmp.ne.s32.totalorder %s61, %s75
      %p77 = scmp.eq.s32.totalorder %s30, 0
      %p78 = por %p76, %p77
      %s80 = sadd.s32 %s79, 1
      %p83 = scmp.eq.s32.totalorder %s24, 1
      %p84 = scmp.ne.s32.totalorder %s79, %s81
      %p85 = scmp.eq.s32.totalorder %s24, 0
      %p86 = por %p84, %p85
      %p87 = scmp.ne.s32.totalorder %s79, %s81
      %p88 = scmp.eq.s32.totalorder %s29, 1
      %p89 = por %p87, %p88
      %p90 = scmp.ne.s32.totalorder %s81, %s82
      %p91 = scmp.eq.s32.totalorder %s29, 0
      %p92 = por %p90, %p91
      %p93 = scmp.ne.s32.totalorder %s81, %s82
      %p94 = scmp.eq.s32.totalorder %s30, 1
      %p95 = por %p93, %p94
      %p97 = scmp.ne.s32.totalorder %s82, %s96
      %p98 = scmp.eq.s32.totalorder %s30, 0
      %p99 = por %p97, %p98
      %s101 = sadd.s32 %s100, 1
      %p104 = scmp.eq.s32.totalorder %s24, 1
      %p105 = scmp.ne.s32.totalorder %s100, %s102
      %p106 = scmp.eq.s32.totalorder %s24, 0
      %p107 = por %p105, %p106
      %p108 = scmp.ne.s32.totalorder %s100, %s102
      %p109 = scmp.eq.s32.totalorder %s29, 1
      %p110 = por %p108, %p109
      %p111 = scmp.ne.s32.totalorder %s102, %s103
      %p112 = scmp.eq.s32.totalorder %s29, 0
      %p113 = por %p111, %p112
      %p114 = scmp.ne.s32.totalorder %s102, %s103
      %p115 = scmp.eq.s32.totalorder %s30, 1
      %p116 = por %p114, %p115
      %p118 = scmp.ne.s32.totalorder %s103, %s117
      %p119 = scmp.eq.s32.totalorder %s30, 0
      %p120 = por %p118, %p119
      %s122 = sadd.s32 %s121, 1
      %p125 = scmp.eq.s32.totalorder %s24, 1
      %p126 = scmp.ne.s32.totalorder %s121, %s123
      %p127 = scmp.eq.s32.totalorder %s24, 0
      %p128 = por %p126, %p127
      %p129 = scmp.ne.s32.totalorder %s121, %s123
      %p130 = scmp.eq.s32.totalorder %s29, 1
      %p131 = por %p129, %p130
      %p132 = scmp.ne.s32.totalorder %s123, %s124
      %p133 = scmp.eq.s32.totalorder %s29, 0
      %p134 = por %p132, %p133
      %p135 = scmp.ne.s32.totalorder %s123, %s124
      %p136 = scmp.eq.s32.totalorder %s30, 1
      %p137 = por %p135, %p136
      %p139 = scmp.ne.s32.totalorder %s124, %s138
      %p140 = scmp.eq.s32.totalorder %s30, 0
      %p141 = por %p139, %p140
      %s143 = sadd.s32 %s142, 1
      %p146 = scmp.eq.s32.totalorder %s24, 1
      %p147 = scmp.ne.s32.totalorder %s142, %s144
      %p148 = scmp.eq.s32.totalorder %s24, 0
      %p149 = por %p147, %p148
      %p150 = scmp.ne.s32.totalorder %s142, %s144
      %p151 = scmp.eq.s32.totalorder %s29, 1
      %p152 = por %p150, %p151
      %p153 = scmp.ne.s32.totalorder %s144, %s145
      %p154 = scmp.eq.s32.totalorder %s29, 0
      %p155 = por %p153, %p154
      %p156 = scmp.ne.s32.totalorder %s144, %s145
      %p157 = scmp.eq.s32.totalorder %s30, 1
      %p158 = por %p156, %p157
      %p160 = scmp.ne.s32.totalorder %s145, %s159
      %p161 = scmp.eq.s32.totalorder %s30, 0
      %p162 = por %p160, %p161
      %s164 = sadd.s32 %s163, 1
      %p167 = scmp.eq.s32.totalorder %s24, 1
      %p168 = scmp.ne.s32.totalorder %s163, %s165
      %p169 = scmp.eq.s32.totalorder %s24, 0
      %p170 = por %p168, %p169
      %p171 = scmp.ne.s32.totalorder %s163, %s165
      %p172 = scmp.eq.s32.totalorder %s29, 1
      %p173 = por %p171, %p172
      %p174 = scmp.ne.s32.totalorder %s165, %s166
      %p175 = scmp.eq.s32.totalorder %s29, 0
      %p176 = por %p174, %p175
      %p177 = scmp.ne.s32.totalorder %s165, %s166
      %p178 = scmp.eq.s32.totalorder %s30, 1
      %p179 = por %p177, %p178
      %p181 = scmp.ne.s32.totalorder %s166, %s180
      %p182 = scmp.eq.s32.totalorder %s30, 0
      %p183 = por %p181, %p182
      %s185 = sadd.s32 %s184, 1
      %p188 = scmp.eq.s32.totalorder %s24, 1
      %p189 = scmp.ne.s32.totalorder %s184, %s186
      %p190 = scmp.eq.s32.totalorder %s24, 0
      %p191 = por %p189, %p190
      %p192 = scmp.ne.s32.totalorder %s184, %s186
      %p193 = scmp.eq.s32.totalorder %s29, 1
      %p194 = por %p192, %p193
      %p195 = scmp.ne.s32.totalorder %s186, %s187
      %p196 = scmp.eq.s32.totalorder %s29, 0
      %p197 = por %p195, %p196
      %p198 = scmp.ne.s32.totalorder %s186, %s187
      %p199 = scmp.eq.s32.totalorder %s30, 1
      %p200 = por %p198, %p199
      %p202 = scmp.ne.s32.totalorder %s187, %s201
      %p203 = scmp.eq.s32.totalorder %s30, 0
      %p204 = por %p202, %p203
      %s206 = sadd.s32 %s205, 1
      %p209 = scmp.eq.s32.totalorder %s24, 1
      %p210 = scmp.ne.s32.totalorder %s205, %s207
      %p211 = scmp.eq.s32.totalorder %s24, 0
      %p212 = por %p210, %p211
      %p213 = scmp.ne.s32.totalorder %s205, %s207
      %p214 = scmp.eq.s32.totalorder %s29, 1
      %p215 = por %p213, %p214
      %p216 = scmp.ne.s32.totalorder %s207, %s208
      %p217 = scmp.eq.s32.totalorder %s29, 0
      %p218 = por %p216, %p217
      %p219 = scmp.ne.s32.totalorder %s207, %s208
      %p220 = scmp.eq.s32.totalorder %s30, 1
      %p221 = por %p219, %p220
      %p223 = scmp.ne.s32.totalorder %s208, %s222
      %p224 = scmp.eq.s32.totalorder %s30, 0
      %p225 = por %p223, %p224
      %s227 = sadd.s32 %s226, 1
      %p230 = scmp.eq.s32.totalorder %s24, 1
      %p231 = scmp.ne.s32.totalorder %s226, %s228
      %p232 = scmp.eq.s32.totalorder %s24, 0
      %p233 = por %p231, %p232
      %p234 = scmp.ne.s32.totalorder %s226, %s228
      %p235 = scmp.eq.s32.totalorder %s29, 1
      %p236 = por %p234, %p235
      %p237 = scmp.ne.s32.totalorder %s228, %s229
      %p238 = scmp.eq.s32.totalorder %s29, 0
      %p239 = por %p237, %p238
      %p240 = scmp.ne.s32.totalorder %s228, %s229
      %p241 = scmp.eq.s32.totalorder %s30, 1
      %p242 = por %p240, %p241
      %p244 = scmp.ne.s32.totalorder %s229, %s243
      %p245 = scmp.eq.s32.totalorder %s30, 0
      %p246 = por %p244, %p245
      %s248 = sadd.s32 %s247, 1
      %p251 = scmp.eq.s32.totalorder %s24, 1
      %p252 = scmp.ne.s32.totalorder %s247, %s249
      %p253 = scmp.eq.s32.totalorder %s24, 0
      %p254 = por %p252, %p253
      %p255 = scmp.ne.s32.totalorder %s247, %s249
      %p256 = scmp.eq.s32.totalorder %s29, 1
      %p257 = por %p255, %p256
      %p258 = scmp.ne.s32.totalorder %s249, %s250
      %p259 = scmp.eq.s32.totalorder %s29, 0
      %p260 = por %p258, %p259
      %p261 = scmp.ne.s32.totalorder %s249, %s250
      %p262 = scmp.eq.s32.totalorder %s30, 1
      %p263 = por %p261, %p262
      %p265 = scmp.ne.s32.totalorder %s250, %s264
      %p266 = scmp.eq.s32.totalorder %s30, 0
      %p267 = por %p265, %p266
      %s269 = sadd.s32 %s268, 1
      %p272 = scmp.eq.s32.totalorder %s24, 1
      %p273 = scmp.ne.s32.totalorder %s268, %s270
      %p274 = scmp.eq.s32.totalorder %s24, 0
      %p275 = por %p273, %p274
      %p276 = scmp.ne.s32.totalorder %s268, %s270
      %p277 = scmp.eq.s32.totalorder %s29, 1
      %p278 = por %p276, %p277
      %p279 = scmp.ne.s32.totalorder %s270, %s271
      %p280 = scmp.eq.s32.totalorder %s29, 0
      %p281 = por %p279, %p280
      %p282 = scmp.ne.s32.totalorder %s270, %s271
      %p283 = scmp.eq.s32.totalorder %s30, 1
      %p284 = por %p282, %p283
      %p286 = scmp.ne.s32.totalorder %s271, %s285
      %p287 = scmp.eq.s32.totalorder %s30, 0
      %p288 = por %p286, %p287
      %s290 = sadd.s32 %s289, 1
      %p293 = scmp.eq.s32.totalorder %s24, 1
      %p294 = scmp.ne.s32.totalorder %s289, %s291
      %p295 = scmp.eq.s32.totalorder %s24, 0
      %p296 = por %p294, %p295
      %p297 = scmp.ne.s32.totalorder %s289, %s291
      %p298 = scmp.eq.s32.totalorder %s29, 1
      %p299 = por %p297, %p298
      %p300 = scmp.ne.s32.totalorder %s291, %s292
      %p301 = scmp.eq.s32.totalorder %s29, 0
      %p302 = por %p300, %p301
      %p303 = scmp.ne.s32.totalorder %s291, %s292
      %p304 = scmp.eq.s32.totalorder %s30, 1
      %p305 = por %p303, %p304
      %p307 = scmp.ne.s32.totalorder %s292, %s306
      %p308 = scmp.eq.s32.totalorder %s30, 0
      %p309 = por %p307, %p308
      %s311 = sadd.s32 %s310, 1
      %p314 = scmp.eq.s32.totalorder %s24, 1
      %p315 = scmp.ne.s32.totalorder %s310, %s312
      %p316 = scmp.eq.s32.totalorder %s24, 0
      %p317 = por %p315, %p316
      %p318 = scmp.ne.s32.totalorder %s310, %s312
      %p319 = scmp.eq.s32.totalorder %s29, 1
      %p320 = por %p318, %p319
      %p321 = scmp.ne.s32.totalorder %s312, %s313
      %p322 = scmp.eq.s32.totalorder %s29, 0
      %p323 = por %p321, %p322
      %p324 = scmp.ne.s32.totalorder %s312, %s313
      %p325 = scmp.eq.s32.totalorder %s30, 1
      %p326 = por %p324, %p325
      %p328 = scmp.ne.s32.totalorder %s313, %s327
      %p329 = scmp.eq.s32.totalorder %s30, 0
      %p330 = por %p328, %p329
      %s332 = sadd.s32 %s331, 1
      %p335 = scmp.eq.s32.totalorder %s24, 1
      %p336 = scmp.ne.s32.totalorder %s331, %s333
      %p337 = scmp.eq.s32.totalorder %s24, 0
      %p338 = por %p336, %p337
      %p339 = scmp.ne.s32.totalorder %s331, %s333
      %p340 = scmp.eq.s32.totalorder %s29, 1
      %p341 = por %p339, %p340
      %p342 = scmp.ne.s32.totalorder %s333, %s334
      %p343 = scmp.eq.s32.totalorder %s29, 0
      %p344 = por %p342, %p343
      %p345 = scmp.ne.s32.totalorder %s333, %s334
      %p346 = scmp.eq.s32.totalorder %s30, 1
      %p347 = por %p345, %p346
      %p349 = scmp.ne.s32.totalorder %s334, %s348
      %p350 = scmp.eq.s32.totalorder %s30, 0
      %p351 = por %p349, %p350
      %s352 = ssub.s32 %s24, %s31
      %p353 = scmp.eq.s32.totalorder %s352, 0
      %s355 = sadd.s32 %s354, 1
      %s356 = scalar_select %p353, %s354, %s355
      %p359 = pneg %p353
      %p360 = scmp.eq.s32.totalorder %s24, 1
      %p361 = por %p359, %p360
      %p362 = scmp.ne.s32.totalorder %s354, %s357
      %p363 = scmp.eq.s32.totalorder %s24, 0
      %p364 = por %p362, %p363
      %p365 = scmp.ne.s32.totalorder %s354, %s357
      %p366 = scmp.eq.s32.totalorder %s29, 1
      %p367 = por %p365, %p366
      %p368 = scmp.ne.s32.totalorder %s357, %s358
      %p369 = scmp.eq.s32.totalorder %s29, 0
      %p370 = por %p368, %p369
      %p371 = scmp.ne.s32.totalorder %s357, %s358
      %p372 = scmp.eq.s32.totalorder %s30, 1
      %p373 = por %p371, %p372
      %p375 = scmp.ne.s32.totalorder %s358, %s374
      %p376 = scmp.eq.s32.totalorder %s30, 0
      %p377 = por %p375, %p376
      %p378 = scmp.le.s32.totalorder 1, %s24
      %p379 = scmp.lt.s32.totalorder %s24, 3
      %p380 = pnand %p378, %p379
      %p381 = pneg %p380
      // Predicated region
      $region9: #{autoencoder_forward.1} parent=5 // pred_check
        _
      $region10: #{autoencoder_forward.1} parent=5 // pred_check_branch
        %383 = sbr.rel (%p380) target = $region12
      $region11: #{autoencoder_forward.1} parent=5 // pred_region
        %s384 = ssub.s32 %s24, 1
        // Predicated region
        $region13: #{autoencoder_forward.1} parent=11 // pred_check
          %p385 = pneg %p71
        $region14: #{autoencoder_forward.1} parent=11 // pred_check_branch
          %387 = sbr.rel (%p385) target = $region16
        $region15: #{autoencoder_forward.1} parent=11 // pred_region
          _
        $region16: #{autoencoder_forward.1} parent=11 // pred_fallthru
          _
        // Predicated region
        $region17: #{autoencoder_forward.1} parent=11 // pred_check
          %p388 = pneg %p92
        $region18: #{autoencoder_forward.1} parent=11 // pred_check_branch
          %390 = sbr.rel (%p388) target = $region20
        $region19: #{autoencoder_forward.1} parent=11 // pred_region
          _
        $region20: #{autoencoder_forward.1} parent=11 // pred_fallthru
          _
        // Predicated region
        $region21: #{autoencoder_forward.1} parent=11 // pred_check
          %p391 = pneg %p113
        $region22: #{autoencoder_forward.1} parent=11 // pred_check_branch
          %393 = sbr.rel (%p391) target = $region24
        $region23: #{autoencoder_forward.1} parent=11 // pred_region
          _
        $region24: #{autoencoder_forward.1} parent=11 // pred_fallthru
          _
        // Predicated region
        $region25: #{autoencoder_forward.1} parent=11 // pred_check
          %p394 = pneg %p134
        $region26: #{autoencoder_forward.1} parent=11 // pred_check_branch
          %396 = sbr.rel (%p394) target = $region28
        $region27: #{autoencoder_forward.1} parent=11 // pred_region
          _
        $region28: #{autoencoder_forward.1} parent=11 // pred_fallthru
          _
        // Predicated region
        $region29: #{autoencoder_forward.1} parent=11 // pred_check
          %p397 = pneg %p155
        $region30: #{autoencoder_forward.1} parent=11 // pred_check_branch
          %399 = sbr.rel (%p397) target = $region32
        $region31: #{autoencoder_forward.1} parent=11 // pred_region
          _
        $region32: #{autoencoder_forward.1} parent=11 // pred_fallthru
          _
        // Predicated region
        $region33: #{autoencoder_forward.1} parent=11 // pred_check
          %p400 = pneg %p176
        $region34: #{autoencoder_forward.1} parent=11 // pred_check_branch
          %402 = sbr.rel (%p400) target = $region36
        $region35: #{autoencoder_forward.1} parent=11 // pred_region
          _
        $region36: #{autoencoder_forward.1} parent=11 // pred_fallthru
          _
        // Predicated region
        $region37: #{autoencoder_forward.1} parent=11 // pred_check
          %p403 = pneg %p197
        $region38: #{autoencoder_forward.1} parent=11 // pred_check_branch
          %405 = sbr.rel (%p403) target = $region40
        $region39: #{autoencoder_forward.1} parent=11 // pred_region
          _
        $region40: #{autoencoder_forward.1} parent=11 // pred_fallthru
          _
        // Predicated region
        $region41: #{autoencoder_forward.1} parent=11 // pred_check
          %p406 = pneg %p218
        $region42: #{autoencoder_forward.1} parent=11 // pred_check_branch
          %408 = sbr.rel (%p406) target = $region44
        $region43: #{autoencoder_forward.1} parent=11 // pred_region
          _
        $region44: #{autoencoder_forward.1} parent=11 // pred_fallthru
          _
        // Predicated region
        $region45: #{autoencoder_forward.1} parent=11 // pred_check
          %p409 = pneg %p239
        $region46: #{autoencoder_forward.1} parent=11 // pred_check_branch
          %411 = sbr.rel (%p409) target = $region48
        $region47: #{autoencoder_forward.1} parent=11 // pred_region
          _
        $region48: #{autoencoder_forward.1} parent=11 // pred_fallthru
          _
        // Predicated region
        $region49: #{autoencoder_forward.1} parent=11 // pred_check
          %p412 = pneg %p260
        $region50: #{autoencoder_forward.1} parent=11 // pred_check_branch
          %414 = sbr.rel (%p412) target = $region52
        $region51: #{autoencoder_forward.1} parent=11 // pred_region
          _
        $region52: #{autoencoder_forward.1} parent=11 // pred_fallthru
          _
        // Predicated region
        $region53: #{autoencoder_forward.1} parent=11 // pred_check
          %p415 = pneg %p281
        $region54: #{autoencoder_forward.1} parent=11 // pred_check_branch
          %417 = sbr.rel (%p415) target = $region56
        $region55: #{autoencoder_forward.1} parent=11 // pred_region
          _
        $region56: #{autoencoder_forward.1} parent=11 // pred_fallthru
          _
        // Predicated region
        $region57: #{autoencoder_forward.1} parent=11 // pred_check
          %p418 = pneg %p302
        $region58: #{autoencoder_forward.1} parent=11 // pred_check_branch
          %420 = sbr.rel (%p418) target = $region60
        $region59: #{autoencoder_forward.1} parent=11 // pred_region
          _
        $region60: #{autoencoder_forward.1} parent=11 // pred_fallthru
          _
        // Predicated region
        $region61: #{autoencoder_forward.1} parent=11 // pred_check
          %p421 = pneg %p323
        $region62: #{autoencoder_forward.1} parent=11 // pred_check_branch
          %423 = sbr.rel (%p421) target = $region64
        $region63: #{autoencoder_forward.1} parent=11 // pred_region
          _
        $region64: #{autoencoder_forward.1} parent=11 // pred_fallthru
          _
        // Predicated region
        $region65: #{autoencoder_forward.1} parent=11 // pred_check
          %p424 = pneg %p344
        $region66: #{autoencoder_forward.1} parent=11 // pred_check_branch
          %426 = sbr.rel (%p424) target = $region68
        $region67: #{autoencoder_forward.1} parent=11 // pred_region
          _
        $region68: #{autoencoder_forward.1} parent=11 // pred_fallthru
          _
      $region12: #{autoencoder_forward.1} parent=5 // pred_fallthru
        _
      %p427 = scmp.lt.s32.totalorder %s24, 2
      // Predicated region
      $region69: #{autoencoder_forward.1} parent=5 // pred_check
        %p428 = pneg %p427
      $region70: #{autoencoder_forward.1} parent=5 // pred_check_branch
        %430 = sbr.rel (%p428) target = $region72
      $region71: #{autoencoder_forward.1} parent=5 // pred_region
        // Predicated region
        $region73: #{autoencoder_forward.1} parent=71 // pred_check
          %p431 = pneg %p44
        $region74: #{autoencoder_forward.1} parent=71 // pred_check_branch
          %433 = sbr.rel (%p431) target = $region76
        $region75: #{autoencoder_forward.1} parent=71 // pred_region
          %p434 = scmp.lt.s32.totalorder %s24, 1
          %s435 = scalar_select %p434, %s24, 1
          %s436 = smul.addr %s435, 7
          %s437 = smul.addr %s436, 8
          %s438 = scalar_lea.vmem %s0, %s437
        $region76: #{autoencoder_forward.1} parent=71 // pred_fallthru
          _
      $region72: #{autoencoder_forward.1} parent=5 // pred_fallthru
        _
      %p439 = scmp.le.s32.totalorder 1, %s24
      %p440 = scmp.lt.s32.totalorder %s24, 3
      %p441 = pnand %p439, %p440
      %p442 = pneg %p441
      // Predicated region
      $region77: #{autoencoder_forward.1} parent=5 // pred_check
        _
      $region78: #{autoencoder_forward.1} parent=5 // pred_check_branch
        %444 = sbr.rel (%p441) target = $region80
      $region79: #{autoencoder_forward.1} parent=5 // pred_region
        %s445 = ssub.s32 %s24, 1
        %p446 = scmp.lt.s32.totalorder %s29, 1
        %s447 = scalar_select %p446, %s29, 1
        %s448 = smul.addr %s447, 7
        %s449 = smul.addr %s448, 8
        %s450 = scalar_lea.vmem %s0, %s449
        %p451 = pneg %p50
        %p452 = pneg %p47
        %p453 = pneg %p71
        %p454 = pneg %p68
        %p455 = pneg %p92
        %p456 = pneg %p89
        %p457 = pneg %p113
        %p458 = pneg %p110
        %p459 = pneg %p134
        %p460 = pneg %p131
        %p461 = pneg %p155
        %p462 = pneg %p152
        %p463 = pneg %p176
        %p464 = pneg %p173
        %p465 = pneg %p197
        %p466 = pneg %p194
        %p467 = pneg %p218
        %p468 = pneg %p215
        %p469 = pneg %p239
        %p470 = pneg %p236
        %p471 = pneg %p260
        %p472 = pneg %p257
        %p473 = pneg %p281
        %p474 = pneg %p278
        %p475 = pneg %p302
        %p476 = pneg %p299
        %p477 = pneg %p323
        %p478 = pneg %p320
        %p479 = pneg %p344
        %p480 = pneg %p341
        %p481 = pneg %p370
        %p482 = pneg %p367
        %s483 = sand.u32 %s357, 1
        %s484 = scalar_lea.sflag [#allocation3], %s483
        %s485 = sand.u32 %s357, 1
        %s486 = smul.addr %s485, 28
        %s487 = scalar_lea.vmem [#allocation2], %s486
        %p488 = scmp.lt.s32.totalorder %s29, 1
        %s489 = scalar_select %p488, %s29, 1
        %s490 = smul.addr %s489, 7
        %s491 = smul.addr %s490, 8
        %s492 = scalar_lea.vmem %s0, %s491
        %v494 = vld [vmem:[%s492] sm:$0xff]
        %v495 = vld [vmem:[%s492 + $0x8] sm:$0xff]
        %v496 = vld [vmem:[%s492 + $0x10] sm:$0xff]
        %v497 = vld [vmem:[%s492 + $0x18] sm:$0xff]
        %v498 = vld [vmem:[%s492 + $0x20] sm:$0xff]
        %v499 = vld [vmem:[%s492 + $0x28] sm:$0xff]
        %v500 = vld [vmem:[%s492 + $0x30] sm:$0xff]
        %v501 = vpack.c.bf16 %v494, %v494
        %v502 = vpack.c.bf16 %v495, %v495
        %v503 = vpack.c.bf16 %v496, %v496
        %v504 = vpack.c.bf16 %v497, %v497
        %v505 = vpack.c.bf16 %v498, %v498
        %v506 = vpack.c.bf16 %v499, %v499
        %v507 = vpack.c.bf16 %v500, %v500
        %v508 = vld [vmem:[%s1] sm:$0xf]
        %v509 = vld [vmem:[%s1 + $0x4] sm:$0xf]
        %v510 = vld [vmem:[%s1 + $0x8] sm:$0xf]
        %v511 = vld [vmem:[%s1 + $0xc] sm:$0xf]
        %v512 = vld [vmem:[%s1 + $0x10] sm:$0xf]
        %v513 = vld [vmem:[%s1 + $0x14] sm:$0xf]
        %v514 = vld [vmem:[%s1 + $0x18] sm:$0xf]
        %v515 = vld [vmem:[%s1 + $0x1c] sm:$0xf]
        %v516 = vld [vmem:[%s1 + $0x20] sm:$0xf]
        %v517 = vld [vmem:[%s1 + $0x24] sm:$0xf]
        %v518 = vld [vmem:[%s1 + $0x28] sm:$0xf]
        %v519 = vld [vmem:[%s1 + $0x2c] sm:$0xf]
        %v520 = vld [vmem:[%s1 + $0x30] sm:$0xf]
        %v521 = vld [vmem:[%s1 + $0x34] sm:$0xf]
        %v522 = vld [vmem:[%s1 + $0x38] sm:$0xf]
        %v523 = vld [vmem:[%s1 + $0x3c] sm:$0xf]
        %v524 = vld [vmem:[%s1 + $0x40] sm:$0xf]
        %v525 = vld [vmem:[%s1 + $0x44] sm:$0xf]
        %v526 = vld [vmem:[%s1 + $0x48] sm:$0xf]
        %v527 = vld [vmem:[%s1 + $0x4c] sm:$0xf]
        %v528 = vld [vmem:[%s1 + $0x50] sm:$0xf]
        %v529 = vld [vmem:[%s1 + $0x54] sm:$0xf]
        %v530 = vld [vmem:[%s1 + $0x58] sm:$0xf]
        %v531 = vld [vmem:[%s1 + $0x5c] sm:$0xf]
        %v532 = vld [vmem:[%s1 + $0x60] sm:$0xf]
        %v533 = vld [vmem:[%s1 + $0x64] sm:$0xf]
        %v534 = vld [vmem:[%s1 + $0x68] sm:$0xf]
        %v535 = vld [vmem:[%s1 + $0x6c] sm:$0xf]
        %v536 = vld [vmem:[%s1 + $0x70] sm:$0xf]
        %v537 = vld [vmem:[%s1 + $0x74] sm:$0xf]
        %v538 = vld [vmem:[%s1 + $0x78] sm:$0xf]
        %v539 = vld [vmem:[%s1 + $0x7c] sm:$0xf]
        %v540 = vld [vmem:[%s1 + $0x80] sm:$0xf]
        %v541 = vld [vmem:[%s1 + $0x84] sm:$0xf]
        %v542 = vld [vmem:[%s1 + $0x88] sm:$0xf]
        %v543 = vld [vmem:[%s1 + $0x8c] sm:$0xf]
        %v544 = vld [vmem:[%s1 + $0x90] sm:$0xf]
        %v545 = vld [vmem:[%s1 + $0x94] sm:$0xf]
        %v546 = vld [vmem:[%s1 + $0x98] sm:$0xf]
        %v547 = vld [vmem:[%s1 + $0x9c] sm:$0xf]
        %v548 = vld [vmem:[%s1 + $0xa0] sm:$0xf]
        %v549 = vld [vmem:[%s1 + $0xa4] sm:$0xf]
        %v550 = vld [vmem:[%s1 + $0xa8] sm:$0xf]
        %v551 = vld [vmem:[%s1 + $0xac] sm:$0xf]
        %v552 = vld [vmem:[%s1 + $0xb0] sm:$0xf]
        %v553 = vld [vmem:[%s1 + $0xb4] sm:$0xf]
        %v554 = vld [vmem:[%s1 + $0xb8] sm:$0xf]
        %v555 = vld [vmem:[%s1 + $0xbc] sm:$0xf]
        %v556 = vld [vmem:[%s1 + $0xc0] sm:$0xf]
        %v557 = vld [vmem:[%s1 + $0xc4] sm:$0xf]
        %v558 = vld [vmem:[%s1 + $0xc8] sm:$0xf]
        %v559 = vld [vmem:[%s1 + $0xcc] sm:$0xf]
        %v560 = vld [vmem:[%s1 + $0xd0] sm:$0xf]
        %v561 = vld [vmem:[%s1 + $0xd4] sm:$0xf]
        %v562 = vld [vmem:[%s1 + $0xd8] sm:$0xf]
        %v563 = vld [vmem:[%s1 + $0xdc] sm:$0xf]
        %v564 = vld [vmem:[%s1 + $0xe0] sm:$0xf]
        %v565 = vld [vmem:[%s1 + $0xe4] sm:$0xf]
        %v566 = vld [vmem:[%s1 + $0xe8] sm:$0xf]
        %v567 = vld [vmem:[%s1 + $0xec] sm:$0xf]
        %v568 = vld [vmem:[%s1 + $0xf0] sm:$0xf]
        %v569 = vld [vmem:[%s1 + $0xf4] sm:$0xf]
        %v570 = vld [vmem:[%s1 + $0xf8] sm:$0xf]
        %v571 = vld [vmem:[%s1 + $0xfc] sm:$0xf]
        %v572 = vld [vmem:[%s1 + $0x100] sm:$0xf]
        %v573 = vld [vmem:[%s1 + $0x104] sm:$0xf]
        %v574 = vld [vmem:[%s1 + $0x108] sm:$0xf]
        %v575 = vld [vmem:[%s1 + $0x10c] sm:$0xf]
        %v576 = vld [vmem:[%s1 + $0x110] sm:$0xf]
        %v577 = vld [vmem:[%s1 + $0x114] sm:$0xf]
        %v578 = vld [vmem:[%s1 + $0x118] sm:$0xf]
        %v579 = vld [vmem:[%s1 + $0x11c] sm:$0xf]
        %v580 = vld [vmem:[%s1 + $0x120] sm:$0xf]
        %v581 = vld [vmem:[%s1 + $0x124] sm:$0xf]
        %v582 = vld [vmem:[%s1 + $0x128] sm:$0xf]
        %v583 = vld [vmem:[%s1 + $0x12c] sm:$0xf]
        %v584 = vld [vmem:[%s1 + $0x130] sm:$0xf]
        %v585 = vld [vmem:[%s1 + $0x134] sm:$0xf]
        %v586 = vld [vmem:[%s1 + $0x138] sm:$0xf]
        %v587 = vld [vmem:[%s1 + $0x13c] sm:$0xf]
        %v588 = vld [vmem:[%s1 + $0x140] sm:$0xf]
        %v589 = vld [vmem:[%s1 + $0x144] sm:$0xf]
        %v590 = vld [vmem:[%s1 + $0x148] sm:$0xf]
        %v591 = vld [vmem:[%s1 + $0x14c] sm:$0xf]
        %v592 = vld [vmem:[%s1 + $0x150] sm:$0xf]
        %v593 = vld [vmem:[%s1 + $0x154] sm:$0xf]
        %v594 = vld [vmem:[%s1 + $0x158] sm:$0xf]
        %v595 = vld [vmem:[%s1 + $0x15c] sm:$0xf]
        %v596 = vld [vmem:[%s1 + $0x160] sm:$0xf]
        %v597 = vld [vmem:[%s1 + $0x164] sm:$0xf]
        %v598 = vld [vmem:[%s1 + $0x168] sm:$0xf]
        %v599 = vld [vmem:[%s1 + $0x16c] sm:$0xf]
        %v600 = vld [vmem:[%s1 + $0x170] sm:$0xf]
        %v601 = vld [vmem:[%s1 + $0x174] sm:$0xf]
        %v602 = vld [vmem:[%s1 + $0x178] sm:$0xf]
        %v603 = vld [vmem:[%s1 + $0x17c] sm:$0xf]
        %v604 = vld [vmem:[%s1 + $0x180] sm:$0xf]
        %v605 = vld [vmem:[%s1 + $0x184] sm:$0xf]
        %v606 = vld [vmem:[%s2] sm:$0x1]
        %v608 = vlaneseq
        %v609 = vshrl.u32 %v608, 7
        %v610 = vsub.s32 0, %v609
        %v611 = vrot.slane %v606, %v610
        %v711 = vunpack.c.l.b16 %v508
        %v712 = vunpack.c.l.b16 %v509
        %v713 = vunpack.c.l.b16 %v510
        %v714 = vunpack.c.l.b16 %v511
        %v715 = vunpack.c.l.b16 %v512
        %v716 = vunpack.c.l.b16 %v513
        %v717 = vunpack.c.l.b16 %v514
        %v718 = vunpack.c.l.b16 %v515
        %v719 = vunpack.c.l.b16 %v516
        %v720 = vunpack.c.l.b16 %v517
        %v721 = vunpack.c.l.b16 %v518
        %v722 = vunpack.c.l.b16 %v519
        %v723 = vunpack.c.l.b16 %v520
        %v724 = vunpack.c.l.b16 %v521
        %v725 = vunpack.c.l.b16 %v522
        %v726 = vunpack.c.l.b16 %v523
        %v727 = vunpack.c.l.b16 %v524
        %v728 = vunpack.c.l.b16 %v525
        %v729 = vunpack.c.l.b16 %v526
        %v730 = vunpack.c.l.b16 %v527
        %v731 = vunpack.c.l.b16 %v528
        %v732 = vunpack.c.l.b16 %v529
        %v733 = vunpack.c.l.b16 %v530
        %v734 = vunpack.c.l.b16 %v531
        %v735 = vunpack.c.l.b16 %v532
        %v736 = vunpack.c.l.b16 %v533
        %v737 = vunpack.c.l.b16 %v534
        %v738 = vunpack.c.l.b16 %v535
        %v739 = vunpack.c.l.b16 %v536
        %v740 = vunpack.c.l.b16 %v537
        %v741 = vunpack.c.l.b16 %v538
        %v742 = vunpack.c.l.b16 %v539
        %v743 = vunpack.c.l.b16 %v540
        %v744 = vunpack.c.l.b16 %v541
        %v745 = vunpack.c.l.b16 %v542
        %v746 = vunpack.c.l.b16 %v543
        %v747 = vunpack.c.l.b16 %v544
        %v748 = vunpack.c.l.b16 %v545
        %v749 = vunpack.c.l.b16 %v546
        %v750 = vunpack.c.l.b16 %v547
        %v751 = vunpack.c.l.b16 %v548
        %v752 = vunpack.c.l.b16 %v549
        %v753 = vunpack.c.l.b16 %v550
        %v754 = vunpack.c.l.b16 %v551
        %v755 = vunpack.c.l.b16 %v552
        %v756 = vunpack.c.l.b16 %v553
        %v757 = vunpack.c.l.b16 %v554
        %v758 = vunpack.c.l.b16 %v555
        %v759 = vunpack.c.l.b16 %v556
        %v760 = vunpack.c.l.b16 %v557
        %v761 = vunpack.c.l.b16 %v558
        %v762 = vunpack.c.l.b16 %v559
        %v763 = vunpack.c.l.b16 %v560
        %v764 = vunpack.c.l.b16 %v561
        %v765 = vunpack.c.l.b16 %v562
        %v766 = vunpack.c.l.b16 %v563
        %v767 = vunpack.c.l.b16 %v564
        %v768 = vunpack.c.l.b16 %v565
        %v769 = vunpack.c.l.b16 %v566
        %v770 = vunpack.c.l.b16 %v567
        %v771 = vunpack.c.l.b16 %v568
        %v772 = vunpack.c.l.b16 %v569
        %v773 = vunpack.c.l.b16 %v570
        %v774 = vunpack.c.l.b16 %v571
        %v775 = vunpack.c.l.b16 %v572
        %v776 = vunpack.c.l.b16 %v573
        %v777 = vunpack.c.l.b16 %v574
        %v778 = vunpack.c.l.b16 %v575
        %v779 = vunpack.c.l.b16 %v576
        %v780 = vunpack.c.l.b16 %v577
        %v781 = vunpack.c.l.b16 %v578
        %v782 = vunpack.c.l.b16 %v579
        %v783 = vunpack.c.l.b16 %v580
        %v784 = vunpack.c.l.b16 %v581
        %v785 = vunpack.c.l.b16 %v582
        %v786 = vunpack.c.l.b16 %v583
        %v787 = vunpack.c.l.b16 %v584
        %v788 = vunpack.c.l.b16 %v585
        %v789 = vunpack.c.l.b16 %v586
        %v790 = vunpack.c.l.b16 %v587
        %v791 = vunpack.c.l.b16 %v588
        %v792 = vunpack.c.l.b16 %v589
        %v793 = vunpack.c.l.b16 %v590
        %v794 = vunpack.c.l.b16 %v591
        %v795 = vunpack.c.l.b16 %v592
        %v796 = vunpack.c.l.b16 %v593
        %v797 = vunpack.c.l.b16 %v594
        %v798 = vunpack.c.l.b16 %v595
        %v799 = vunpack.c.l.b16 %v596
        %v800 = vunpack.c.l.b16 %v597
        %v801 = vunpack.c.l.b16 %v598
        %v802 = vunpack.c.l.b16 %v599
        %v803 = vunpack.c.l.b16 %v600
        %v804 = vunpack.c.l.b16 %v601
        %v805 = vunpack.c.l.b16 %v602
        %v806 = vunpack.c.l.b16 %v603
        %v807 = vunpack.c.l.b16 %v604
        %v808 = vunpack.c.l.b16 %v605
        %v809 = vpack.c.b16 %v712, %v711
        %v810 = vpack.c.b16 %v714, %v713
        %v811 = vpack.c.b16 %v716, %v715
        %v812 = vpack.c.b16 %v718, %v717
        %v813 = vpack.c.b16 %v720, %v719
        %v814 = vpack.c.b16 %v722, %v721
        %v815 = vpack.c.b16 %v724, %v723
        %v816 = vpack.c.b16 %v726, %v725
        %v817 = vpack.c.b16 %v728, %v727
        %v818 = vpack.c.b16 %v730, %v729
        %v819 = vpack.c.b16 %v732, %v731
        %v820 = vpack.c.b16 %v734, %v733
        %v821 = vpack.c.b16 %v736, %v735
        %v822 = vpack.c.b16 %v738, %v737
        %v823 = vpack.c.b16 %v740, %v739
        %v824 = vpack.c.b16 %v742, %v741
        %v825 = vpack.c.b16 %v744, %v743
        %v826 = vpack.c.b16 %v746, %v745
        %v827 = vpack.c.b16 %v748, %v747
        %v828 = vpack.c.b16 %v750, %v749
        %v829 = vpack.c.b16 %v752, %v751
        %v830 = vpack.c.b16 %v754, %v753
        %v831 = vpack.c.b16 %v756, %v755
        %v832 = vpack.c.b16 %v758, %v757
        %v833 = vpack.c.b16 %v760, %v759
        %v834 = vpack.c.b16 %v762, %v761
        %v835 = vpack.c.b16 %v764, %v763
        %v836 = vpack.c.b16 %v766, %v765
        %v837 = vpack.c.b16 %v768, %v767
        %v838 = vpack.c.b16 %v770, %v769
        %v839 = vpack.c.b16 %v772, %v771
        %v840 = vpack.c.b16 %v774, %v773
        %v841 = vpack.c.b16 %v776, %v775
        %v842 = vpack.c.b16 %v778, %v777
        %v843 = vpack.c.b16 %v780, %v779
        %v844 = vpack.c.b16 %v782, %v781
        %v845 = vpack.c.b16 %v784, %v783
        %v846 = vpack.c.b16 %v786, %v785
        %v847 = vpack.c.b16 %v788, %v787
        %v848 = vpack.c.b16 %v790, %v789
        %v849 = vpack.c.b16 %v792, %v791
        %v850 = vpack.c.b16 %v794, %v793
        %v851 = vpack.c.b16 %v796, %v795
        %v852 = vpack.c.b16 %v798, %v797
        %v853 = vpack.c.b16 %v800, %v799
        %v854 = vpack.c.b16 %v802, %v801
        %v855 = vpack.c.b16 %v804, %v803
        %v856 = vpack.c.b16 %v806, %v805
        %v857 = vpack.c.b16 %v808, %v807
        %vm907 = vcmask 130048
        %v909 = vsel %vm907, %v507, 0
        %911 = vmatprep.subr.bf16.mxu0 0
        %912 = vmatpush1.bf16.msra.mxu0 %v809
        %913 = vmatprep.subr.bf16.mxu0 0
        %914 = vmatpush1.bf16.msra.mxu0 %v810
        %915 = vmatprep.subr.bf16.mxu0 0
        %916 = vmatpush1.bf16.msra.mxu0 %v811
        %917 = vmatprep.subr.bf16.mxu0 0
        %918 = vmatpush1.bf16.msra.mxu0 %v812
        %919 = vmatprep.subr.bf16.mxu0 0
        %920 = vmatpush1.bf16.msra.mxu0 %v813
        %921 = vmatprep.subr.bf16.mxu0 0
        %922 = vmatpush1.bf16.msra.mxu0 %v814
        %923 = vmatprep.subr.bf16.mxu0 0
        %924 = vmatpush1.bf16.msra.mxu0 %v815
        %925 = vmatprep.subr.bf16.mxu0 0
        %926 = vmatpush1.bf16.msra.mxu0 %v816
        %927 = vmatprep.subr.bf16.mxu0 0
        %928 = vmatpush1.bf16.msra.mxu0 %v817
        %929 = vmatprep.subr.bf16.mxu0 0
        %930 = vmatpush1.bf16.msra.mxu0 %v818
        %931 = vmatprep.subr.bf16.mxu0 0
        %932 = vmatpush1.bf16.msra.mxu0 %v819
        %933 = vmatprep.subr.bf16.mxu0 0
        %934 = vmatpush1.bf16.msra.mxu0 %v820
        %935 = vmatprep.subr.bf16.mxu0 0
        %936 = vmatpush1.bf16.msra.mxu0 %v821
        %937 = vmatprep.subr.bf16.mxu0 0
        %938 = vmatpush1.bf16.msra.mxu0 %v822
        %939 = vmatprep.subr.bf16.mxu0 0
        %940 = vmatpush1.bf16.msra.mxu0 %v823
        %941 = vmatprep.subr.bf16.mxu0 0
        %942 = vmatpush1.bf16.msra.mxu0 %v824
        %943 = vmatprep.mubr.bf16.mxu0 %v502
        %944 = vmatmul.mubr.bf16.gmra.mrb[0].mxu0 %v501
        %v945 = vpop.f32.mrb[0].mxu0
        %v946 = vadd.f32 %v611, %v945
        %v947 = vpop.f32.mrb[0].mxu0
        %v948 = vpop.f32.mrb[0].mxu0
        %v949 = vpop.f32.mrb[0].mxu0
        %950 = vdwg.mxu0
        %951 = vmatprep.subr.bf16.mxu0 0
        %952 = vmatpush1.bf16.msra.mxu0 %v825
        %953 = vmatprep.subr.bf16.mxu0 0
        %954 = vmatpush1.bf16.msra.mxu0 %v826
        %955 = vmatprep.subr.bf16.mxu0 0
        %956 = vmatpush1.bf16.msra.mxu0 %v827
        %957 = vmatprep.subr.bf16.mxu0 0
        %958 = vmatpush1.bf16.msra.mxu0 %v828
        %959 = vmatprep.subr.bf16.mxu0 0
        %960 = vmatpush1.bf16.msra.mxu0 %v829
        %961 = vmatprep.subr.bf16.mxu0 0
        %962 = vmatpush1.bf16.msra.mxu0 %v830
        %963 = vmatprep.subr.bf16.mxu0 0
        %964 = vmatpush1.bf16.msra.mxu0 %v831
        %965 = vmatprep.subr.bf16.mxu0 0
        %966 = vmatpush1.bf16.msra.mxu0 %v832
        %967 = vmatprep.subr.bf16.mxu0 0
        %968 = vmatpush1.bf16.msra.mxu0 %v833
        %969 = vmatprep.subr.bf16.mxu0 0
        %970 = vmatpush1.bf16.msra.mxu0 %v834
        %971 = vmatprep.subr.bf16.mxu0 0
        %972 = vmatpush1.bf16.msra.mxu0 %v835
        %973 = vmatprep.subr.bf16.mxu0 0
        %974 = vmatpush1.bf16.msra.mxu0 %v836
        %975 = vmatprep.subr.bf16.mxu0 0
        %976 = vmatpush1.bf16.msra.mxu0 %v837
        %977 = vmatprep.subr.bf16.mxu0 0
        %978 = vmatpush1.bf16.msra.mxu0 %v838
        %979 = vmatprep.subr.bf16.mxu0 0
        %980 = vmatpush1.bf16.msra.mxu0 %v839
        %981 = vmatprep.subr.bf16.mxu0 0
        %982 = vmatpush1.bf16.msra.mxu0 %v840
        %983 = vmatprep.mubr.bf16.mxu0 %v504
        %984 = vmatmul.mubr.bf16.gmra.mrb[0].mxu0 %v503
        %v985 = vpop.f32.mrb[0].mxu0
        %v986 = vadd.f32 %v946, %v985
        %v987 = vpop.f32.mrb[0].mxu0
        %v988 = vpop.f32.mrb[0].mxu0
        %v989 = vpop.f32.mrb[0].mxu0
        %990 = vdwg.mxu0
        %991 = vmatprep.subr.bf16.mxu0 0
        %992 = vmatpush1.bf16.msra.mxu0 %v841
        %993 = vmatprep.subr.bf16.mxu0 0
        %994 = vmatpush1.bf16.msra.mxu0 %v842
        %995 = vmatprep.subr.bf16.mxu0 0
        %996 = vmatpush1.bf16.msra.mxu0 %v843
        %997 = vmatprep.subr.bf16.mxu0 0
        %998 = vmatpush1.bf16.msra.mxu0 %v844
        %999 = vmatprep.subr.bf16.mxu0 0
        %1000 = vmatpush1.bf16.msra.mxu0 %v845
        %1001 = vmatprep.subr.bf16.mxu0 0
        %1002 = vmatpush1.bf16.msra.mxu0 %v846
        %1003 = vmatprep.subr.bf16.mxu0 0
        %1004 = vmatpush1.bf16.msra.mxu0 %v847
        %1005 = vmatprep.subr.bf16.mxu0 0
        %1006 = vmatpush1.bf16.msra.mxu0 %v848
        %1007 = vmatprep.subr.bf16.mxu0 0
        %1008 = vmatpush1.bf16.msra.mxu0 %v849
        %1009 = vmatprep.subr.bf16.mxu0 0
        %1010 = vmatpush1.bf16.msra.mxu0 %v850
        %1011 = vmatprep.subr.bf16.mxu0 0
        %1012 = vmatpush1.bf16.msra.mxu0 %v851
        %1013 = vmatprep.subr.bf16.mxu0 0
        %1014 = vmatpush1.bf16.msra.mxu0 %v852
        %1015 = vmatprep.subr.bf16.mxu0 0
        %1016 = vmatpush1.bf16.msra.mxu0 %v853
        %1017 = vmatprep.subr.bf16.mxu0 0
        %1018 = vmatpush1.bf16.msra.mxu0 %v854
        %1019 = vmatprep.subr.bf16.mxu0 0
        %1020 = vmatpush1.bf16.msra.mxu0 %v855
        %1021 = vmatprep.subr.bf16.mxu0 0
        %1022 = vmatpush1.bf16.msra.mxu0 %v856
        %1023 = vmatprep.mubr.bf16.mxu0 %v506
        %1024 = vmatmul.mubr.bf16.gmra.mrb[0].mxu0 %v505
        %v1025 = vpop.f32.mrb[0].mxu0
        %v1026 = vadd.f32 %v986, %v1025
        %v1027 = vpop.f32.mrb[0].mxu0
        %v1028 = vpop.f32.mrb[0].mxu0
        %v1029 = vpop.f32.mrb[0].mxu0
        %1030 = vdwg.mxu0
        %1031 = vmatprep.subr.bf16.mxu0 0
        %1032 = vmatpush1.bf16.msra.mxu0 %v857
        %1033 = vmatprep.subr.bf16.mxu0 0
        %1034 = vmatpush1.bf16.msra.mxu0 0
        %1035 = vmatprep.subr.bf16.mxu0 0
        %1036 = vmatpush1.bf16.msra.mxu0 0
        %1037 = vmatprep.subr.bf16.mxu0 0
        %1038 = vmatpush1.bf16.msra.mxu0 0
        %1039 = vmatprep.subr.bf16.mxu0 0
        %1040 = vmatpush1.bf16.msra.mxu0 0
        %1041 = vmatprep.subr.bf16.mxu0 0
        %1042 = vmatpush1.bf16.msra.mxu0 0
        %1043 = vmatprep.subr.bf16.mxu0 0
        %1044 = vmatpush1.bf16.msra.mxu0 0
        %1045 = vmatprep.subr.bf16.mxu0 0
        %1046 = vmatpush1.bf16.msra.mxu0 0
        %1047 = vmatprep.subr.bf16.mxu0 0
        %1048 = vmatpush1.bf16.msra.mxu0 0
        %1049 = vmatprep.subr.bf16.mxu0 0
        %1050 = vmatpush1.bf16.msra.mxu0 0
        %1051 = vmatprep.subr.bf16.mxu0 0
        %1052 = vmatpush1.bf16.msra.mxu0 0
        %1053 = vmatprep.subr.bf16.mxu0 0
        %1054 = vmatpush1.bf16.msra.mxu0 0
        %1055 = vmatprep.subr.bf16.mxu0 0
        %1056 = vmatpush1.bf16.msra.mxu0 0
        %1057 = vmatprep.subr.bf16.mxu0 0
        %1058 = vmatpush1.bf16.msra.mxu0 0
        %1059 = vmatprep.subr.bf16.mxu0 0
        %1060 = vmatpush1.bf16.msra.mxu0 0
        %1061 = vmatprep.subr.bf16.mxu0 0
        %1062 = vmatpush1.bf16.msra.mxu0 0
        %1063 = vmatprep.mubr.bf16.mxu0 0
        %1064 = vmatmul.mubr.bf16.gmra.mrb[0].mxu0 %v909
        %v1065 = vpop.f32.mrb[0].mxu0
        %v1066 = vadd.f32 %v1026, %v1065
        %v1067 = vpop.f32.mrb[0].mxu0
        %v1068 = vpop.f32.mrb[0].mxu0
        %v1069 = vpop.f32.mrb[0].mxu0
        %1070 = vdwg.mxu0
        %v1071 = vmax.f32 %v1066, 0.0
        %v1072 = vpack.c.bf16 %v1071, %v1071
        %v1073 = vld [vmem:[%s3] sm:$0xf]
        %v1074 = vld [vmem:[%s3 + $0x4] sm:$0xf]
        %v1075 = vld [vmem:[%s3 + $0x8] sm:$0xf]
        %v1076 = vld [vmem:[%s3 + $0xc] sm:$0xf]
        %v1077 = vld [vmem:[%s3 + $0x10] sm:$0xf]
        %v1078 = vld [vmem:[%s3 + $0x14] sm:$0xf]
        %v1079 = vld [vmem:[%s3 + $0x18] sm:$0xf]
        %v1080 = vld [vmem:[%s3 + $0x1c] sm:$0xf]
        %v1081 = vld [vmem:[%s3 + $0x20] sm:$0xf]
        %v1082 = vld [vmem:[%s3 + $0x24] sm:$0xf]
        %v1083 = vld [vmem:[%s3 + $0x28] sm:$0xf]
        %v1084 = vld [vmem:[%s3 + $0x2c] sm:$0xf]
        %v1085 = vld [vmem:[%s3 + $0x30] sm:$0xf]
        %v1086 = vld [vmem:[%s3 + $0x34] sm:$0xf]
        %v1087 = vld [vmem:[%s3 + $0x38] sm:$0xf]
        %v1088 = vld [vmem:[%s3 + $0x3c] sm:$0xf]
        %v1089 = vld [vmem:[%s4] sm:$0x1]
        %v1091 = vlaneseq
        %v1092 = vshrl.u32 %v1091, 7
        %v1093 = vsub.s32 0, %v1092
        %v1094 = vrot.slane %v1089, %v1093
        %v1112 = vunpack.c.l.b16 %v1073
        %v1113 = vunpack.c.l.b16 %v1074
        %v1114 = vunpack.c.l.b16 %v1075
        %v1115 = vunpack.c.l.b16 %v1076
        %v1116 = vunpack.c.l.b16 %v1077
        %v1117 = vunpack.c.l.b16 %v1078
        %v1118 = vunpack.c.l.b16 %v1079
        %v1119 = vunpack.c.l.b16 %v1080
        %v1120 = vunpack.c.l.b16 %v1081
        %v1121 = vunpack.c.l.b16 %v1082
        %v1122 = vunpack.c.l.b16 %v1083
        %v1123 = vunpack.c.l.b16 %v1084
        %v1124 = vunpack.c.l.b16 %v1085
        %v1125 = vunpack.c.l.b16 %v1086
        %v1126 = vunpack.c.l.b16 %v1087
        %v1127 = vunpack.c.l.b16 %v1088
        %v1128 = vpack.c.b16 %v1113, %v1112
        %v1129 = vpack.c.b16 %v1115, %v1114
        %v1130 = vpack.c.b16 %v1117, %v1116
        %v1131 = vpack.c.b16 %v1119, %v1118
        %v1132 = vpack.c.b16 %v1121, %v1120
        %v1133 = vpack.c.b16 %v1123, %v1122
        %v1134 = vpack.c.b16 %v1125, %v1124
        %v1135 = vpack.c.b16 %v1127, %v1126
        %1144 = vmatprep.subr.bf16.mxu0 0
        %1145 = vmatpush1.bf16.msra.mxu0 %v1128
        %1146 = vmatprep.subr.bf16.mxu0 0
        %1147 = vmatpush1.bf16.msra.mxu0 %v1129
        %1148 = vmatprep.subr.bf16.mxu0 0
        %1149 = vmatpush1.bf16.msra.mxu0 %v1130
        %1150 = vmatprep.subr.bf16.mxu0 0
        %1151 = vmatpush1.bf16.msra.mxu0 %v1131
        %1152 = vmatprep.subr.bf16.mxu0 0
        %1153 = vmatpush1.bf16.msra.mxu0 %v1132
        %1154 = vmatprep.subr.bf16.mxu0 0
        %1155 = vmatpush1.bf16.msra.mxu0 %v1133
        %1156 = vmatprep.subr.bf16.mxu0 0
        %1157 = vmatpush1.bf16.msra.mxu0 %v1134
        %1158 = vmatprep.subr.bf16.mxu0 0
        %1159 = vmatpush1.bf16.msra.mxu0 %v1135
        %1160 = vmatprep.subr.bf16.mxu0 0
        %1161 = vmatpush1.bf16.msra.mxu0 0
        %1162 = vmatprep.subr.bf16.mxu0 0
        %1163 = vmatpush1.bf16.msra.mxu0 0
        %1164 = vmatprep.subr.bf16.mxu0 0
        %1165 = vmatpush1.bf16.msra.mxu0 0
        %1166 = vmatprep.subr.bf16.mxu0 0
        %1167 = vmatpush1.bf16.msra.mxu0 0
        %1168 = vmatprep.subr.bf16.mxu0 0
        %1169 = vmatpush1.bf16.msra.mxu0 0
        %1170 = vmatprep.subr.bf16.mxu0 0
        %1171 = vmatpush1.bf16.msra.mxu0 0
        %1172 = vmatprep.subr.bf16.mxu0 0
        %1173 = vmatpush1.bf16.msra.mxu0 0
        %1174 = vmatprep.subr.bf16.mxu0 0
        %1175 = vmatpush1.bf16.msra.mxu0 0
        %1176 = vmatprep.mubr.bf16.mxu0 0
        %1177 = vmatmul.mubr.bf16.gmra.mrb[0].mxu0 %v1072
        %v1178 = vpop.f32.mrb[0].mxu0
        %v1179 = vadd.f32 %v1094, %v1178
        %v1180 = vpop.f32.mrb[0].mxu0
        %v1181 = vpop.f32.mrb[0].mxu0
        %v1182 = vpop.f32.mrb[0].mxu0
        %1183 = vdwg.mxu0
        %v1184 = vmax.f32 %v1179, 0.0
        %v1185 = vpack.c.bf16 %v1184, %v1184
        %v1186 = vld [vmem:[%s5] sm:$0xf]
        %v1187 = vld [vmem:[%s5 + $0x4] sm:$0xf]
        %v1188 = vld [vmem:[%s5 + $0x8] sm:$0xf]
        %v1189 = vld [vmem:[%s5 + $0xc] sm:$0xf]
        %v1190 = vld [vmem:[%s5 + $0x10] sm:$0xf]
        %v1191 = vld [vmem:[%s5 + $0x14] sm:$0xf]
        %v1192 = vld [vmem:[%s5 + $0x18] sm:$0xf]
        %v1193 = vld [vmem:[%s5 + $0x1c] sm:$0xf]
        %v1194 = vld [vmem:[%s6] sm:$0x1]
        %v1196 = vlaneseq
        %v1197 = vshrl.u32 %v1196, 7
        %v1198 = vsub.s32 0, %v1197
        %v1199 = vrot.slane %v1194, %v1198
        %v1209 = vunpack.c.l.b16 %v1186
        %v1210 = vunpack.c.l.b16 %v1187
        %v1211 = vunpack.c.l.b16 %v1188
        %v1212 = vunpack.c.l.b16 %v1189
        %v1213 = vunpack.c.l.b16 %v1190
        %v1214 = vunpack.c.l.b16 %v1191
        %v1215 = vunpack.c.l.b16 %v1192
        %v1216 = vunpack.c.l.b16 %v1193
        %v1217 = vpack.c.b16 %v1210, %v1209
        %v1218 = vpack.c.b16 %v1212, %v1211
        %v1219 = vpack.c.b16 %v1214, %v1213
        %v1220 = vpack.c.b16 %v1216, %v1215
        %vm1225 = vcmask 523264
        %v1227 = vsel %vm1225, %v1185, 0
        %1229 = vmatprep.subr.bf16.mxu0 0
        %1230 = vmatpush1.bf16.msra.mxu0 %v1217
        %1231 = vmatprep.subr.bf16.mxu0 0
        %1232 = vmatpush1.bf16.msra.mxu0 %v1218
        %1233 = vmatprep.subr.bf16.mxu0 0
        %1234 = vmatpush1.bf16.msra.mxu0 %v1219
        %1235 = vmatprep.subr.bf16.mxu0 0
        %1236 = vmatpush1.bf16.msra.mxu0 %v1220
        %1237 = vmatprep.subr.bf16.mxu0 0
        %1238 = vmatpush1.bf16.msra.mxu0 0
        %1239 = vmatprep.subr.bf16.mxu0 0
        %1240 = vmatpush1.bf16.msra.mxu0 0
        %1241 = vmatprep.subr.bf16.mxu0 0
        %1242 = vmatpush1.bf16.msra.mxu0 0
        %1243 = vmatprep.subr.bf16.mxu0 0
        %1244 = vmatpush1.bf16.msra.mxu0 0
        %1245 = vmatprep.subr.bf16.mxu0 0
        %1246 = vmatpush1.bf16.msra.mxu0 0
        %1247 = vmatprep.subr.bf16.mxu0 0
        %1248 = vmatpush1.bf16.msra.mxu0 0
        %1249 = vmatprep.subr.bf16.mxu0 0
        %1250 = vmatpush1.bf16.msra.mxu0 0
        %1251 = vmatprep.subr.bf16.mxu0 0
        %1252 = vmatpush1.bf16.msra.mxu0 0
        %1253 = vmatprep.subr.bf16.mxu0 0
        %1254 = vmatpush1.bf16.msra.mxu0 0
        %1255 = vmatprep.subr.bf16.mxu0 0
        %1256 = vmatpush1.bf16.msra.mxu0 0
        %1257 = vmatprep.subr.bf16.mxu0 0
        %1258 = vmatpush1.bf16.msra.mxu0 0
        %1259 = vmatprep.subr.bf16.mxu0 0
        %1260 = vmatpush1.bf16.msra.mxu0 0
        %1261 = vmatprep.mubr.bf16.mxu0 0
        %1262 = vmatmul.mubr.bf16.gmra.mrb[0].mxu0 %v1227
        %v1263 = vpop.f32.mrb[0].mxu0
        %v1264 = vadd.f32 %v1199, %v1263
        %v1265 = vpop.f32.mrb[0].mxu0
        %v1266 = vpop.f32.mrb[0].mxu0
        %v1267 = vpop.f32.mrb[0].mxu0
        %1268 = vdwg.mxu0
        %v1269 = vmax.f32 %v1264, 0.0
        %v1270 = vpack.c.bf16 %v1269, %v1269
        %v1271 = vld [vmem:[%s7] sm:$0xf]
        %v1272 = vld [vmem:[%s7 + $0x4] sm:$0x3]
        %v1273 = vld [vmem:[%s8] sm:$0x1]
        %v1275 = vlaneseq
        %v1276 = vshrl.u32 %v1275, 7
        %v1277 = vsub.s32 0, %v1276
        %v1278 = vrot.slane %v1273, %v1277
        %v1282 = vunpack.c.l.b16 %v1271
        %v1283 = vunpack.c.l.b16 %v1272
        %v1284 = vpack.c.b16 %v1283, %v1282
        %vm1285 = vcmask 97280
        %v1287 = vsel %vm1285, %v1270, 0
        %vm1289 = vcmask 1045504
        %v1291 = vsel %vm1289, %v1284, 0
        %1293 = vmatprep.subr.bf16.mxu0 0
        %1294 = vmatpush1.bf16.msra.mxu0 %v1291
        %1295 = vmatprep.subr.bf16.mxu0 0
        %1296 = vmatpush1.bf16.msra.mxu0 0
        %1297 = vmatprep.subr.bf16.mxu0 0
        %1298 = vmatpush1.bf16.msra.mxu0 0
        %1299 = vmatprep.subr.bf16.mxu0 0
        %1300 = vmatpush1.bf16.msra.mxu0 0
        %1301 = vmatprep.subr.bf16.mxu0 0
        %1302 = vmatpush1.bf16.msra.mxu0 0
        %1303 = vmatprep.subr.bf16.mxu0 0
        %1304 = vmatpush1.bf16.msra.mxu0 0
        %1305 = vmatprep.subr.bf16.mxu0 0
        %1306 = vmatpush1.bf16.msra.mxu0 0
        %1307 = vmatprep.subr.bf16.mxu0 0
        %1308 = vmatpush1.bf16.msra.mxu0 0
        %1309 = vmatprep.subr.bf16.mxu0 0
        %1310 = vmatpush1.bf16.msra.mxu0 0
        %1311 = vmatprep.subr.bf16.mxu0 0
        %1312 = vmatpush1.bf16.msra.mxu0 0
        %1313 = vmatprep.subr.bf16.mxu0 0
        %1314 = vmatpush1.bf16.msra.mxu0 0
        %1315 = vmatprep.subr.bf16.mxu0 0
        %1316 = vmatpush1.bf16.msra.mxu0 0
        %1317 = vmatprep.subr.bf16.mxu0 0
        %1318 = vmatpush1.bf16.msra.mxu0 0
        %1319 = vmatprep.subr.bf16.mxu0 0
        %1320 = vmatpush1.bf16.msra.mxu0 0
        %1321 = vmatprep.subr.bf16.mxu0 0
        %1322 = vmatpush1.bf16.msra.mxu0 0
        %1323 = vmatprep.subr.bf16.mxu0 0
        %1324 = vmatpush1.bf16.msra.mxu0 0
        %1325 = vmatprep.mubr.bf16.mxu0 0
        %1326 = vmatmul.mubr.bf16.gmra.mrb[0].mxu0 %v1287
        %v1327 = vpop.f32.mrb[0].mxu0
        %v1328 = vadd.f32 %v1278, %v1327
        %v1329 = vpop.f32.mrb[0].mxu0
        %v1330 = vpop.f32.mrb[0].mxu0
        %v1331 = vpop.f32.mrb[0].mxu0
        %1332 = vdwg.mxu0
        %v1333 = vmax.f32 %v1328, 0.0
        %v1334 = vpack.c.bf16 %v1333, %v1333
        %v1335 = vld [vmem:[%s9] sm:$0xf]
        %v1336 = vld [vmem:[%s9 + $0x4] sm:$0x3]
        %v1337 = vld [vmem:[%s10] sm:$0x1]
        %v1339 = vlaneseq
        %v1340 = vshrl.u32 %v1339, 7
        %v1341 = vsub.s32 0, %v1340
        %v1342 = vrot.slane %v1337, %v1341
        %v1346 = vunpack.c.l.b16 %v1335
        %v1347 = vunpack.c.l.b16 %v1336
        %v1348 = vpack.c.b16 %v1347, %v1346
        %v1350 = vsel %vm1285, %v1334, 0
        %v1353 = vsel %vm1289, %v1348, 0
        %1355 = vmatprep.subr.bf16.mxu0 0
        %1356 = vmatpush1.bf16.msra.mxu0 %v1353
        %1357 = vmatprep.subr.bf16.mxu0 0
        %1358 = vmatpush1.bf16.msra.mxu0 0
        %1359 = vmatprep.subr.bf16.mxu0 0
        %1360 = vmatpush1.bf16.msra.mxu0 0
        %1361 = vmatprep.subr.bf16.mxu0 0
        %1362 = vmatpush1.bf16.msra.mxu0 0
        %1363 = vmatprep.subr.bf16.mxu0 0
        %1364 = vmatpush1.bf16.msra.mxu0 0
        %1365 = vmatprep.subr.bf16.mxu0 0
        %1366 = vmatpush1.bf16.msra.mxu0 0
        %1367 = vmatprep.subr.bf16.mxu0 0
        %1368 = vmatpush1.bf16.msra.mxu0 0
        %1369 = vmatprep.subr.bf16.mxu0 0
        %1370 = vmatpush1.bf16.msra.mxu0 0
        %1371 = vmatprep.subr.bf16.mxu0 0
        %1372 = vmatpush1.bf16.msra.mxu0 0
        %1373 = vmatprep.subr.bf16.mxu0 0
        %1374 = vmatpush1.bf16.msra.mxu0 0
        %1375 = vmatprep.subr.bf16.mxu0 0
        %1376 = vmatpush1.bf16.msra.mxu0 0
        %1377 = vmatprep.subr.bf16.mxu0 0
        %1378 = vmatpush1.bf16.msra.mxu0 0
        %1379 = vmatprep.subr.bf16.mxu0 0
        %1380 = vmatpush1.bf16.msra.mxu0 0
        %1381 = vmatprep.subr.bf16.mxu0 0
        %1382 = vmatpush1.bf16.msra.mxu0 0
        %1383 = vmatprep.subr.bf16.mxu0 0
        %1384 = vmatpush1.bf16.msra.mxu0 0
        %1385 = vmatprep.subr.bf16.mxu0 0
        %1386 = vmatpush1.bf16.msra.mxu0 0
        %1387 = vmatprep.mubr.bf16.mxu0 0
        %1388 = vmatmul.mubr.bf16.gmra.mrb[0].mxu0 %v1350
        %v1389 = vpop.f32.mrb[0].mxu0
        %v1390 = vadd.f32 %v1342, %v1389
        %v1391 = vpop.f32.mrb[0].mxu0
        %v1392 = vpop.f32.mrb[0].mxu0
        %v1393 = vpop.f32.mrb[0].mxu0
        %1394 = vdwg.mxu0
        %v1395 = vmax.f32 %v1390, 0.0
        %v1396 = vpack.c.bf16 %v1395, %v1395
        %v1397 = vld [vmem:[%s11] sm:$0xf]
        %v1398 = vld [vmem:[%s11 + $0x4] sm:$0xf]
        %v1399 = vld [vmem:[%s11 + $0x8] sm:$0xf]
        %v1400 = vld [vmem:[%s11 + $0xc] sm:$0xf]
        %v1401 = vld [vmem:[%s11 + $0x10] sm:$0xf]
        %v1402 = vld [vmem:[%s11 + $0x14] sm:$0xf]
        %v1403 = vld [vmem:[%s11 + $0x18] sm:$0xf]
        %v1404 = vld [vmem:[%s11 + $0x1c] sm:$0xf]
        %v1405 = vld [vmem:[%s12] sm:$0x1]
        %v1407 = vlaneseq
        %v1408 = vshrl.u32 %v1407, 7
        %v1409 = vsub.s32 0, %v1408
        %v1410 = vrot.slane %v1405, %v1409
        %v1420 = vunpack.c.l.b16 %v1397
        %v1421 = vunpack.c.l.b16 %v1398
        %v1422 = vunpack.c.l.b16 %v1399
        %v1423 = vunpack.c.l.b16 %v1400
        %v1424 = vunpack.c.l.b16 %v1401
        %v1425 = vunpack.c.l.b16 %v1402
        %v1426 = vunpack.c.l.b16 %v1403
        %v1427 = vunpack.c.l.b16 %v1404
        %v1428 = vpack.c.b16 %v1421, %v1420
        %v1429 = vpack.c.b16 %v1423, %v1422
        %v1430 = vpack.c.b16 %v1425, %v1424
        %v1431 = vpack.c.b16 %v1427, %v1426
        %v1437 = vsel %vm1225, %v1396, 0
        %1439 = vmatprep.subr.bf16.mxu0 0
        %1440 = vmatpush1.bf16.msra.mxu0 %v1428
        %1441 = vmatprep.subr.bf16.mxu0 0
        %1442 = vmatpush1.bf16.msra.mxu0 %v1429
        %1443 = vmatprep.subr.bf16.mxu0 0
        %1444 = vmatpush1.bf16.msra.mxu0 %v1430
        %1445 = vmatprep.subr.bf16.mxu0 0
        %1446 = vmatpush1.bf16.msra.mxu0 %v1431
        %1447 = vmatprep.subr.bf16.mxu0 0
        %1448 = vmatpush1.bf16.msra.mxu0 0
        %1449 = vmatprep.subr.bf16.mxu0 0
        %1450 = vmatpush1.bf16.msra.mxu0 0
        %1451 = vmatprep.subr.bf16.mxu0 0
        %1452 = vmatpush1.bf16.msra.mxu0 0
        %1453 = vmatprep.subr.bf16.mxu0 0
        %1454 = vmatpush1.bf16.msra.mxu0 0
        %1455 = vmatprep.subr.bf16.mxu0 0
        %1456 = vmatpush1.bf16.msra.mxu0 0
        %1457 = vmatprep.subr.bf16.mxu0 0
        %1458 = vmatpush1.bf16.msra.mxu0 0
        %1459 = vmatprep.subr.bf16.mxu0 0
        %1460 = vmatpush1.bf16.msra.mxu0 0
        %1461 = vmatprep.subr.bf16.mxu0 0
        %1462 = vmatpush1.bf16.msra.mxu0 0
        %1463 = vmatprep.subr.bf16.mxu0 0
        %1464 = vmatpush1.bf16.msra.mxu0 0
        %1465 = vmatprep.subr.bf16.mxu0 0
        %1466 = vmatpush1.bf16.msra.mxu0 0
        %1467 = vmatprep.subr.bf16.mxu0 0
        %1468 = vmatpush1.bf16.msra.mxu0 0
        %1469 = vmatprep.subr.bf16.mxu0 0
        %1470 = vmatpush1.bf16.msra.mxu0 0
        %1471 = vmatprep.mubr.bf16.mxu0 0
        %1472 = vmatmul.mubr.bf16.gmra.mrb[0].mxu0 %v1437
        %v1473 = vpop.f32.mrb[0].mxu0
        %v1474 = vadd.f32 %v1410, %v1473
        %v1475 = vpop.f32.mrb[0].mxu0
        %v1476 = vpop.f32.mrb[0].mxu0
        %v1477 = vpop.f32.mrb[0].mxu0
        %1478 = vdwg.mxu0
        %v1479 = vmax.f32 %v1474, 0.0
        %v1480 = vpack.c.bf16 %v1479, %v1479
        %v1481 = vld [vmem:[%s13] sm:$0xff]
        %v1482 = vld [vmem:[%s13 + $0x8] sm:$0xff]
        %v1483 = vld [vmem:[%s13 + $0x10] sm:$0xff]
        %v1484 = vld [vmem:[%s13 + $0x18] sm:$0xf]
        %v1485 = vld [vmem:[%s13 + $0x1c] sm:$0xff]
        %v1486 = vld [vmem:[%s13 + $0x24] sm:$0xff]
        %v1487 = vld [vmem:[%s13 + $0x2c] sm:$0xff]
        %v1488 = vld [vmem:[%s13 + $0x34] sm:$0xf]
        %v1489 = vld [vmem:[%s13 + $0x38] sm:$0xff]
        %v1490 = vld [vmem:[%s13 + $0x40] sm:$0xff]
        %v1491 = vld [vmem:[%s13 + $0x48] sm:$0xff]
        %v1492 = vld [vmem:[%s13 + $0x50] sm:$0xf]
        %v1493 = vld [vmem:[%s13 + $0x54] sm:$0xff]
        %v1494 = vld [vmem:[%s13 + $0x5c] sm:$0xff]
        %v1495 = vld [vmem:[%s13 + $0x64] sm:$0xff]
        %v1496 = vld [vmem:[%s13 + $0x6c] sm:$0xf]
        %v1497 = vld [vmem:[%s13 + $0x70] sm:$0xff]
        %v1498 = vld [vmem:[%s13 + $0x78] sm:$0xff]
        %v1499 = vld [vmem:[%s13 + $0x80] sm:$0xff]
        %v1500 = vld [vmem:[%s13 + $0x88] sm:$0xf]
        %v1501 = vld [vmem:[%s13 + $0x8c] sm:$0xff]
        %v1502 = vld [vmem:[%s13 + $0x94] sm:$0xff]
        %v1503 = vld [vmem:[%s13 + $0x9c] sm:$0xff]
        %v1504 = vld [vmem:[%s13 + $0xa4] sm:$0xf]
        %v1505 = vld [vmem:[%s13 + $0xa8] sm:$0xff]
        %v1506 = vld [vmem:[%s13 + $0xb0] sm:$0xff]
        %v1507 = vld [vmem:[%s13 + $0xb8] sm:$0xff]
        %v1508 = vld [vmem:[%s13 + $0xc0] sm:$0xf]
        %v1509 = vld [vmem:[%s13 + $0xc4] sm:$0xff]
        %v1510 = vld [vmem:[%s13 + $0xcc] sm:$0xff]
        %v1511 = vld [vmem:[%s13 + $0xd4] sm:$0xff]
        %v1512 = vld [vmem:[%s13 + $0xdc] sm:$0xf]
        %v1513 = vld [vmem:[%s13 + $0xe0] sm:$0xff]
        %v1514 = vld [vmem:[%s13 + $0xe8] sm:$0xff]
        %v1515 = vld [vmem:[%s13 + $0xf0] sm:$0xff]
        %v1516 = vld [vmem:[%s13 + $0xf8] sm:$0xf]
        %v1517 = vld [vmem:[%s13 + $0xfc] sm:$0xff]
        %v1518 = vld [vmem:[%s13 + $0x104] sm:$0xff]
        %v1519 = vld [vmem:[%s13 + $0x10c] sm:$0xff]
        %v1520 = vld [vmem:[%s13 + $0x114] sm:$0xf]
        %v1521 = vld [vmem:[%s13 + $0x118] sm:$0xff]
        %v1522 = vld [vmem:[%s13 + $0x120] sm:$0xff]
        %v1523 = vld [vmem:[%s13 + $0x128] sm:$0xff]
        %v1524 = vld [vmem:[%s13 + $0x130] sm:$0xf]
        %v1525 = vld [vmem:[%s13 + $0x134] sm:$0xff]
        %v1526 = vld [vmem:[%s13 + $0x13c] sm:$0xff]
        %v1527 = vld [vmem:[%s13 + $0x144] sm:$0xff]
        %v1528 = vld [vmem:[%s13 + $0x14c] sm:$0xf]
        %v1529 = vld [vmem:[%s13 + $0x150] sm:$0xff]
        %v1530 = vld [vmem:[%s13 + $0x158] sm:$0xff]
        %v1531 = vld [vmem:[%s13 + $0x160] sm:$0xff]
        %v1532 = vld [vmem:[%s13 + $0x168] sm:$0xf]
        %v1533 = vld [vmem:[%s13 + $0x16c] sm:$0xff]
        %v1534 = vld [vmem:[%s13 + $0x174] sm:$0xff]
        %v1535 = vld [vmem:[%s13 + $0x17c] sm:$0xff]
        %v1536 = vld [vmem:[%s13 + $0x184] sm:$0xf]
        %v1537 = vld [vmem:[%s13 + $0x188] sm:$0xff]
        %v1538 = vld [vmem:[%s13 + $0x190] sm:$0xff]
        %v1539 = vld [vmem:[%s13 + $0x198] sm:$0xff]
        %v1540 = vld [vmem:[%s13 + $0x1a0] sm:$0xf]
        %v1541 = vld [vmem:[%s13 + $0x1a4] sm:$0xff]
        %v1542 = vld [vmem:[%s13 + $0x1ac] sm:$0xff]
        %v1543 = vld [vmem:[%s13 + $0x1b4] sm:$0xff]
        %v1544 = vld [vmem:[%s13 + $0x1bc] sm:$0xf]
        %v1545 = vld [vmem:[%s14] sm:$0x7f]
        %v1547 = vlaneseq
        %v1548 = vshrl.u32 %v1547, 7
        %v1549 = vsub.s32 0, %v1548
        %v1550 = vrot.slane %v1545, %v1549
        %v1551 = vlaneseq
        %v1552 = vshrl.u32 %v1551, 7
        %v1553 = vsub.s32 1, %v1552
        %v1554 = vrot.slane %v1545, %v1553
        %v1555 = vlaneseq
        %v1556 = vshrl.u32 %v1555, 7
        %v1557 = vsub.s32 2, %v1556
        %v1558 = vrot.slane %v1545, %v1557
        %v1559 = vlaneseq
        %v1560 = vshrl.u32 %v1559, 7
        %v1561 = vsub.s32 3, %v1560
        %v1562 = vrot.slane %v1545, %v1561
        %v1563 = vlaneseq
        %v1564 = vshrl.u32 %v1563, 7
        %v1565 = vsub.s32 4, %v1564
        %v1566 = vrot.slane %v1545, %v1565
        %v1567 = vlaneseq
        %v1568 = vshrl.u32 %v1567, 7
        %v1569 = vsub.s32 5, %v1568
        %v1570 = vrot.slane %v1545, %v1569
        %v1571 = vlaneseq
        %v1572 = vshrl.u32 %v1571, 7
        %v1573 = vsub.s32 6, %v1572
        %v1574 = vrot.slane %v1545, %v1573
        %v1646 = vunpack.c.l.b16 %v1481
        %v1647 = vunpack.c.h.b16 %v1481
        %v1648 = vunpack.c.l.b16 %v1482
        %v1649 = vunpack.c.h.b16 %v1482
        %v1650 = vunpack.c.l.b16 %v1483
        %v1651 = vunpack.c.h.b16 %v1483
        %v1652 = vunpack.c.l.b16 %v1484
        %v1653 = vunpack.c.l.b16 %v1485
        %v1654 = vunpack.c.h.b16 %v1485
        %v1655 = vunpack.c.l.b16 %v1486
        %v1656 = vunpack.c.h.b16 %v1486
        %v1657 = vunpack.c.l.b16 %v1487
        %v1658 = vunpack.c.h.b16 %v1487
        %v1659 = vunpack.c.l.b16 %v1488
        %v1660 = vunpack.c.l.b16 %v1489
        %v1661 = vunpack.c.h.b16 %v1489
        %v1662 = vunpack.c.l.b16 %v1490
        %v1663 = vunpack.c.h.b16 %v1490
        %v1664 = vunpack.c.l.b16 %v1491
        %v1665 = vunpack.c.h.b16 %v1491
        %v1666 = vunpack.c.l.b16 %v1492
        %v1667 = vunpack.c.l.b16 %v1493
        %v1668 = vunpack.c.h.b16 %v1493
        %v1669 = vunpack.c.l.b16 %v1494
        %v1670 = vunpack.c.h.b16 %v1494
        %v1671 = vunpack.c.l.b16 %v1495
        %v1672 = vunpack.c.h.b16 %v1495
        %v1673 = vunpack.c.l.b16 %v1496
        %v1674 = vunpack.c.l.b16 %v1497
        %v1675 = vunpack.c.h.b16 %v1497
        %v1676 = vunpack.c.l.b16 %v1498
        %v1677 = vunpack.c.h.b16 %v1498
        %v1678 = vunpack.c.l.b16 %v1499
        %v1679 = vunpack.c.h.b16 %v1499
        %v1680 = vunpack.c.l.b16 %v1500
        %v1681 = vunpack.c.l.b16 %v1501
        %v1682 = vunpack.c.h.b16 %v1501
        %v1683 = vunpack.c.l.b16 %v1502
        %v1684 = vunpack.c.h.b16 %v1502
        %v1685 = vunpack.c.l.b16 %v1503
        %v1686 = vunpack.c.h.b16 %v1503
        %v1687 = vunpack.c.l.b16 %v1504
        %v1688 = vunpack.c.l.b16 %v1505
        %v1689 = vunpack.c.h.b16 %v1505
        %v1690 = vunpack.c.l.b16 %v1506
        %v1691 = vunpack.c.h.b16 %v1506
        %v1692 = vunpack.c.l.b16 %v1507
        %v1693 = vunpack.c.h.b16 %v1507
        %v1694 = vunpack.c.l.b16 %v1508
        %v1695 = vunpack.c.l.b16 %v1509
        %v1696 = vunpack.c.h.b16 %v1509
        %v1697 = vunpack.c.l.b16 %v1510
        %v1698 = vunpack.c.h.b16 %v1510
        %v1699 = vunpack.c.l.b16 %v1511
        %v1700 = vunpack.c.h.b16 %v1511
        %v1701 = vunpack.c.l.b16 %v1512
        %v1702 = vunpack.c.l.b16 %v1513
        %v1703 = vunpack.c.h.b16 %v1513
        %v1704 = vunpack.c.l.b16 %v1514
        %v1705 = vunpack.c.h.b16 %v1514
        %v1706 = vunpack.c.l.b16 %v1515
        %v1707 = vunpack.c.h.b16 %v1515
        %v1708 = vunpack.c.l.b16 %v1516
        %v1709 = vunpack.c.l.b16 %v1517
        %v1710 = vunpack.c.h.b16 %v1517
        %v1711 = vunpack.c.l.b16 %v1518
        %v1712 = vunpack.c.h.b16 %v1518
        %v1713 = vunpack.c.l.b16 %v1519
        %v1714 = vunpack.c.h.b16 %v1519
        %v1715 = vunpack.c.l.b16 %v1520
        %v1716 = vunpack.c.l.b16 %v1521
        %v1717 = vunpack.c.h.b16 %v1521
        %v1718 = vunpack.c.l.b16 %v1522
        %v1719 = vunpack.c.h.b16 %v1522
        %v1720 = vunpack.c.l.b16 %v1523
        %v1721 = vunpack.c.h.b16 %v1523
        %v1722 = vunpack.c.l.b16 %v1524
        %v1723 = vunpack.c.l.b16 %v1525
        %v1724 = vunpack.c.h.b16 %v1525
        %v1725 = vunpack.c.l.b16 %v1526
        %v1726 = vunpack.c.h.b16 %v1526
        %v1727 = vunpack.c.l.b16 %v1527
        %v1728 = vunpack.c.h.b16 %v1527
        %v1729 = vunpack.c.l.b16 %v1528
        %v1730 = vunpack.c.l.b16 %v1529
        %v1731 = vunpack.c.h.b16 %v1529
        %v1732 = vunpack.c.l.b16 %v1530
        %v1733 = vunpack.c.h.b16 %v1530
        %v1734 = vunpack.c.l.b16 %v1531
        %v1735 = vunpack.c.h.b16 %v1531
        %v1736 = vunpack.c.l.b16 %v1532
        %v1737 = vunpack.c.l.b16 %v1533
        %v1738 = vunpack.c.h.b16 %v1533
        %v1739 = vunpack.c.l.b16 %v1534
        %v1740 = vunpack.c.h.b16 %v1534
        %v1741 = vunpack.c.l.b16 %v1535
        %v1742 = vunpack.c.h.b16 %v1535
        %v1743 = vunpack.c.l.b16 %v1536
        %v1744 = vunpack.c.l.b16 %v1537
        %v1745 = vunpack.c.h.b16 %v1537
        %v1746 = vunpack.c.l.b16 %v1538
        %v1747 = vunpack.c.h.b16 %v1538
        %v1748 = vunpack.c.l.b16 %v1539
        %v1749 = vunpack.c.h.b16 %v1539
        %v1750 = vunpack.c.l.b16 %v1540
        %v1751 = vunpack.c.l.b16 %v1541
        %v1752 = vunpack.c.h.b16 %v1541
        %v1753 = vunpack.c.l.b16 %v1542
        %v1754 = vunpack.c.h.b16 %v1542
        %v1755 = vunpack.c.l.b16 %v1543
        %v1756 = vunpack.c.h.b16 %v1543
        %v1757 = vunpack.c.l.b16 %v1544
        %v1758 = vpack.c.b16 %v1653, %v1646
        %v1759 = vpack.c.b16 %v1654, %v1647
        %v1760 = vpack.c.b16 %v1655, %v1648
        %v1761 = vpack.c.b16 %v1656, %v1649
        %v1762 = vpack.c.b16 %v1657, %v1650
        %v1763 = vpack.c.b16 %v1658, %v1651
        %v1764 = vpack.c.b16 %v1659, %v1652
        %v1765 = vpack.c.b16 %v1667, %v1660
        %v1766 = vpack.c.b16 %v1668, %v1661
        %v1767 = vpack.c.b16 %v1669, %v1662
        %v1768 = vpack.c.b16 %v1670, %v1663
        %v1769 = vpack.c.b16 %v1671, %v1664
        %v1770 = vpack.c.b16 %v1672, %v1665
        %v1771 = vpack.c.b16 %v1673, %v1666
        %v1772 = vpack.c.b16 %v1681, %v1674
        %v1773 = vpack.c.b16 %v1682, %v1675
        %v1774 = vpack.c.b16 %v1683, %v1676
        %v1775 = vpack.c.b16 %v1684, %v1677
        %v1776 = vpack.c.b16 %v1685, %v1678
        %v1777 = vpack.c.b16 %v1686, %v1679
        %v1778 = vpack.c.b16 %v1687, %v1680
        %v1779 = vpack.c.b16 %v1695, %v1688
        %v1780 = vpack.c.b16 %v1696, %v1689
        %v1781 = vpack.c.b16 %v1697, %v1690
        %v1782 = vpack.c.b16 %v1698, %v1691
        %v1783 = vpack.c.b16 %v1699, %v1692
        %v1784 = vpack.c.b16 %v1700, %v1693
        %v1785 = vpack.c.b16 %v1701, %v1694
        %v1786 = vpack.c.b16 %v1709, %v1702
        %v1787 = vpack.c.b16 %v1710, %v1703
        %v1788 = vpack.c.b16 %v1711, %v1704
        %v1789 = vpack.c.b16 %v1712, %v1705
        %v1790 = vpack.c.b16 %v1713, %v1706
        %v1791 = vpack.c.b16 %v1714, %v1707
        %v1792 = vpack.c.b16 %v1715, %v1708
        %v1793 = vpack.c.b16 %v1723, %v1716
        %v1794 = vpack.c.b16 %v1724, %v1717
        %v1795 = vpack.c.b16 %v1725, %v1718
        %v1796 = vpack.c.b16 %v1726, %v1719
        %v1797 = vpack.c.b16 %v1727, %v1720
        %v1798 = vpack.c.b16 %v1728, %v1721
        %v1799 = vpack.c.b16 %v1729, %v1722
        %v1800 = vpack.c.b16 %v1737, %v1730
        %v1801 = vpack.c.b16 %v1738, %v1731
        %v1802 = vpack.c.b16 %v1739, %v1732
        %v1803 = vpack.c.b16 %v1740, %v1733
        %v1804 = vpack.c.b16 %v1741, %v1734
        %v1805 = vpack.c.b16 %v1742, %v1735
        %v1806 = vpack.c.b16 %v1743, %v1736
        %v1807 = vpack.c.b16 %v1751, %v1744
        %v1808 = vpack.c.b16 %v1752, %v1745
        %v1809 = vpack.c.b16 %v1753, %v1746
        %v1810 = vpack.c.b16 %v1754, %v1747
        %v1811 = vpack.c.b16 %v1755, %v1748
        %v1812 = vpack.c.b16 %v1756, %v1749
        %v1813 = vpack.c.b16 %v1757, %v1750
        %1870 = vmatprep.subr.bf16.mxu0 %v1759
        %1871 = vmatpush1.bf16.msra.mxu0 %v1758
        %1872 = vmatprep.subr.bf16.mxu0 %v1766
        %1873 = vmatpush1.bf16.msra.mxu0 %v1765
        %1874 = vmatprep.subr.bf16.mxu0 %v1773
        %1875 = vmatpush1.bf16.msra.mxu0 %v1772
        %1876 = vmatprep.subr.bf16.mxu0 %v1780
        %1877 = vmatpush1.bf16.msra.mxu0 %v1779
        %1878 = vmatprep.subr.bf16.mxu0 %v1787
        %1879 = vmatpush1.bf16.msra.mxu0 %v1786
        %1880 = vmatprep.subr.bf16.mxu0 %v1794
        %1881 = vmatpush1.bf16.msra.mxu0 %v1793
        %1882 = vmatprep.subr.bf16.mxu0 %v1801
        %1883 = vmatpush1.bf16.msra.mxu0 %v1800
        %1884 = vmatprep.subr.bf16.mxu0 %v1808
        %1885 = vmatpush1.bf16.msra.mxu0 %v1807
        %1886 = vmatprep.subr.bf16.mxu0 0
        %1887 = vmatpush1.bf16.msra.mxu0 0
        %1888 = vmatprep.subr.bf16.mxu0 0
        %1889 = vmatpush1.bf16.msra.mxu0 0
        %1890 = vmatprep.subr.bf16.mxu0 0
        %1891 = vmatpush1.bf16.msra.mxu0 0
        %1892 = vmatprep.subr.bf16.mxu0 0
        %1893 = vmatpush1.bf16.msra.mxu0 0
        %1894 = vmatprep.subr.bf16.mxu0 0
        %1895 = vmatpush1.bf16.msra.mxu0 0
        %1896 = vmatprep.subr.bf16.mxu0 0
        %1897 = vmatpush1.bf16.msra.mxu0 0
        %1898 = vmatprep.subr.bf16.mxu0 0
        %1899 = vmatpush1.bf16.msra.mxu0 0
        %1900 = vmatprep.subr.bf16.mxu0 0
        %1901 = vmatpush1.bf16.msra.mxu0 0
        %1902 = vmatprep.mubr.bf16.mxu0 0
        %1903 = vmatmul.mubr.bf16.gmra.mrb[0].mxu0 %v1480
        %v1904 = vpop.f32.mrb[0].mxu0
        %v1905 = vadd.f32 %v1550, %v1904
        %v1906 = vpop.f32.mrb[0].mxu0
        %v1907 = vadd.f32 %v1554, %v1906
        %v1908 = vpop.f32.mrb[0].mxu0
        %v1909 = vpop.f32.mrb[0].mxu0
        %1910 = vdwg.mxu0
        %1911 = vmatprep.subr.bf16.mxu0 %v1761
        %1912 = vmatpush1.bf16.msra.mxu0 %v1760
        %1913 = vmatprep.subr.bf16.mxu0 %v1768
        %1914 = vmatpush1.bf16.msra.mxu0 %v1767
        %1915 = vmatprep.subr.bf16.mxu0 %v1775
        %1916 = vmatpush1.bf16.msra.mxu0 %v1774
        %1917 = vmatprep.subr.bf16.mxu0 %v1782
        %1918 = vmatpush1.bf16.msra.mxu0 %v1781
        %1919 = vmatprep.subr.bf16.mxu0 %v1789
        %1920 = vmatpush1.bf16.msra.mxu0 %v1788
        %1921 = vmatprep.subr.bf16.mxu0 %v1796
        %1922 = vmatpush1.bf16.msra.mxu0 %v1795
        %1923 = vmatprep.subr.bf16.mxu0 %v1803
        %1924 = vmatpush1.bf16.msra.mxu0 %v1802
        %1925 = vmatprep.subr.bf16.mxu0 %v1810
        %1926 = vmatpush1.bf16.msra.mxu0 %v1809
        %1927 = vmatprep.subr.bf16.mxu0 0
        %1928 = vmatpush1.bf16.msra.mxu0 0
        %1929 = vmatprep.subr.bf16.mxu0 0
        %1930 = vmatpush1.bf16.msra.mxu0 0
        %1931 = vmatprep.subr.bf16.mxu0 0
        %1932 = vmatpush1.bf16.msra.mxu0 0
        %1933 = vmatprep.subr.bf16.mxu0 0
        %1934 = vmatpush1.bf16.msra.mxu0 0
        %1935 = vmatprep.subr.bf16.mxu0 0
        %1936 = vmatpush1.bf16.msra.mxu0 0
        %1937 = vmatprep.subr.bf16.mxu0 0
        %1938 = vmatpush1.bf16.msra.mxu0 0
        %1939 = vmatprep.subr.bf16.mxu0 0
        %1940 = vmatpush1.bf16.msra.mxu0 0
        %1941 = vmatprep.subr.bf16.mxu0 0
        %1942 = vmatpush1.bf16.msra.mxu0 0
        %1943 = vmatprep.mubr.bf16.mxu0 0
        %1944 = vmatmul.mubr.bf16.gmra.mrb[0].mxu0 %v1480
        %v1945 = vpop.f32.mrb[0].mxu0
        %v1946 = vadd.f32 %v1558, %v1945
        %v1947 = vpop.f32.mrb[0].mxu0
        %v1948 = vadd.f32 %v1562, %v1947
        %v1949 = vpop.f32.mrb[0].mxu0
        %v1950 = vpop.f32.mrb[0].mxu0
        %1951 = vdwg.mxu0
        %1952 = vmatprep.subr.bf16.mxu0 %v1763
        %1953 = vmatpush1.bf16.msra.mxu0 %v1762
        %1954 = vmatprep.subr.bf16.mxu0 %v1770
        %1955 = vmatpush1.bf16.msra.mxu0 %v1769
        %1956 = vmatprep.subr.bf16.mxu0 %v1777
        %1957 = vmatpush1.bf16.msra.mxu0 %v1776
        %1958 = vmatprep.subr.bf16.mxu0 %v1784
        %1959 = vmatpush1.bf16.msra.mxu0 %v1783
        %1960 = vmatprep.subr.bf16.mxu0 %v1791
        %1961 = vmatpush1.bf16.msra.mxu0 %v1790
        %1962 = vmatprep.subr.bf16.mxu0 %v1798
        %1963 = vmatpush1.bf16.msra.mxu0 %v1797
        %1964 = vmatprep.subr.bf16.mxu0 %v1805
        %1965 = vmatpush1.bf16.msra.mxu0 %v1804
        %1966 = vmatprep.subr.bf16.mxu0 %v1812
        %1967 = vmatpush1.bf16.msra.mxu0 %v1811
        %1968 = vmatprep.subr.bf16.mxu0 0
        %1969 = vmatpush1.bf16.msra.mxu0 0
        %1970 = vmatprep.subr.bf16.mxu0 0
        %1971 = vmatpush1.bf16.msra.mxu0 0
        %1972 = vmatprep.subr.bf16.mxu0 0
        %1973 = vmatpush1.bf16.msra.mxu0 0
        %1974 = vmatprep.subr.bf16.mxu0 0
        %1975 = vmatpush1.bf16.msra.mxu0 0
        %1976 = vmatprep.subr.bf16.mxu0 0
        %1977 = vmatpush1.bf16.msra.mxu0 0
        %1978 = vmatprep.subr.bf16.mxu0 0
        %1979 = vmatpush1.bf16.msra.mxu0 0
        %1980 = vmatprep.subr.bf16.mxu0 0
        %1981 = vmatpush1.bf16.msra.mxu0 0
        %1982 = vmatprep.subr.bf16.mxu0 0
        %1983 = vmatpush1.bf16.msra.mxu0 0
        %1984 = vmatprep.mubr.bf16.mxu0 0
        %1985 = vmatmul.mubr.bf16.gmra.mrb[0].mxu0 %v1480
        %v1986 = vpop.f32.mrb[0].mxu0
        %v1987 = vadd.f32 %v1566, %v1986
        %v1988 = vpop.f32.mrb[0].mxu0
        %v1989 = vadd.f32 %v1570, %v1988
        %v1990 = vpop.f32.mrb[0].mxu0
        %v1991 = vpop.f32.mrb[0].mxu0
        %1992 = vdwg.mxu0
        %1993 = vmatprep.subr.bf16.mxu0 0
        %1994 = vmatpush1.bf16.msra.mxu0 %v1764
        %1995 = vmatprep.subr.bf16.mxu0 0
        %1996 = vmatpush1.bf16.msra.mxu0 %v1771
        %1997 = vmatprep.subr.bf16.mxu0 0
        %1998 = vmatpush1.bf16.msra.mxu0 %v1778
        %1999 = vmatprep.subr.bf16.mxu0 0
        %2000 = vmatpush1.bf16.msra.mxu0 %v1785
        %2001 = vmatprep.subr.bf16.mxu0 0
        %2002 = vmatpush1.bf16.msra.mxu0 %v1792
        %2003 = vmatprep.subr.bf16.mxu0 0
        %2004 = vmatpush1.bf16.msra.mxu0 %v1799
        %2005 = vmatprep.subr.bf16.mxu0 0
        %2006 = vmatpush1.bf16.msra.mxu0 %v1806
        %2007 = vmatprep.subr.bf16.mxu0 0
        %2008 = vmatpush1.bf16.msra.mxu0 %v1813
        %2009 = vmatprep.subr.bf16.mxu0 0
        %2010 = vmatpush1.bf16.msra.mxu0 0
        %2011 = vmatprep.subr.bf16.mxu0 0
        %2012 = vmatpush1.bf16.msra.mxu0 0
        %2013 = vmatprep.subr.bf16.mxu0 0
        %2014 = vmatpush1.bf16.msra.mxu0 0
        %2015 = vmatprep.subr.bf16.mxu0 0
        %2016 = vmatpush1.bf16.msra.mxu0 0
        %2017 = vmatprep.subr.bf16.mxu0 0
        %2018 = vmatpush1.bf16.msra.mxu0 0
        %2019 = vmatprep.subr.bf16.mxu0 0
        %2020 = vmatpush1.bf16.msra.mxu0 0
        %2021 = vmatprep.subr.bf16.mxu0 0
        %2022 = vmatpush1.bf16.msra.mxu0 0
        %2023 = vmatprep.subr.bf16.mxu0 0
        %2024 = vmatpush1.bf16.msra.mxu0 0
        %2025 = vmatprep.mubr.bf16.mxu0 0
        %2026 = vmatmul.mubr.bf16.gmra.mrb[0].mxu0 %v1480
        %v2027 = vpop.f32.mrb[0].mxu0
        %v2028 = vadd.f32 %v1574, %v2027
        %v2029 = vpop.f32.mrb[0].mxu0
        %v2030 = vpop.f32.mrb[0].mxu0
        %v2031 = vpop.f32.mrb[0].mxu0
        %2032 = vdwg.mxu0
        %v2033 = vxor.u32 %v1905, 2147483648
        %v2034 = vxor.u32 %v1907, 2147483648
        %v2035 = vxor.u32 %v1946, 2147483648
        %v2036 = vxor.u32 %v1948, 2147483648
        %v2037 = vxor.u32 %v1987, 2147483648
        %v2038 = vxor.u32 %v1989, 2147483648
        %v2039 = vxor.u32 %v2028, 2147483648
        %v2040 = vmul.f32 %v2033, 1.442695
        %v2041 = vpow.pop %v2040
        %v2042 = vmul.f32 %v2034, 1.442695
        %v2043 = vpow.pop %v2042
        %v2044 = vmul.f32 %v2035, 1.442695
        %v2045 = vpow.pop %v2044
        %v2046 = vmul.f32 %v2036, 1.442695
        %v2047 = vpow.pop %v2046
        %v2048 = vmul.f32 %v2037, 1.442695
        %v2049 = vpow.pop %v2048
        %v2050 = vmul.f32 %v2038, 1.442695
        %v2051 = vpow.pop %v2050
        %v2052 = vmul.f32 %v2039, 1.442695
        %v2053 = vpow.pop %v2052
        %v2054 = vadd.f32 %v2041, 1.0
        %v2055 = vadd.f32 %v2043, 1.0
        %v2056 = vadd.f32 %v2045, 1.0
        %v2057 = vadd.f32 %v2047, 1.0
        %v2058 = vadd.f32 %v2049, 1.0
        %v2059 = vadd.f32 %v2051, 1.0
        %v2060 = vadd.f32 %v2053, 1.0
        %v2061 = vrcp.pop %v2054
        %v2062 = vmul.f32 1.0, %v2061
        %v2063 = vrcp.pop %v2055
        %v2064 = vmul.f32 1.0, %v2063
        %v2065 = vrcp.pop %v2056
        %v2066 = vmul.f32 1.0, %v2065
        %v2067 = vrcp.pop %v2057
        %v2068 = vmul.f32 1.0, %v2067
        %v2069 = vrcp.pop %v2058
        %v2070 = vmul.f32 1.0, %v2069
        %v2071 = vrcp.pop %v2059
        %v2072 = vmul.f32 1.0, %v2071
        %v2073 = vrcp.pop %v2060
        %v2074 = vmul.f32 1.0, %v2073
        %v2075 = vpack.c.bf16 %v2062, %v2062
        %v2076 = vpack.c.bf16 %v2064, %v2064
        %v2077 = vpack.c.bf16 %v2066, %v2066
        %v2078 = vpack.c.bf16 %v2068, %v2068
        %v2079 = vpack.c.bf16 %v2070, %v2070
        %v2080 = vpack.c.bf16 %v2072, %v2072
        %v2081 = vpack.c.bf16 %v2074, %v2074
        %v2089 = vunpack.c.l.b16 %v2075
        %v2090 = vunpack.c.l.b16 %v2076
        %v2091 = vunpack.c.l.b16 %v2077
        %v2092 = vunpack.c.l.b16 %v2078
        %v2093 = vunpack.c.l.b16 %v2079
        %v2094 = vunpack.c.l.b16 %v2080
        %v2095 = vunpack.c.l.b16 %v2081
        %v2096 = vpack.c.b16 %v2090, %v2089
        %v2097 = vpack.c.b16 %v2092, %v2091
        %v2098 = vpack.c.b16 %v2094, %v2093
        %v2099 = vpack.c.b16 %v2095, %v2095
        %2104 = vst [vmem:[%s487] sm:$0xff] %v2096
        %2105 = vst [vmem:[%s487 + $0x8] sm:$0xff] %v2097
        %2106 = vst [vmem:[%s487 + $0x10] sm:$0xff] %v2098
        %vm2107 = vcmask 125952
        %2108 = vst.msk [vmem:[%s487 + $0x18] sm:$0xf] %vm2107, %v2099
        %s2109 = sand.u32 %s357, 1
        %s2110 = scalar_lea.sflag [#allocation3], %s2109
        %s2111 = sand.u32 %s357, 1
        %s2112 = smul.addr %s2111, 28
        %s2113 = scalar_lea.vmem [#allocation2], %s2112
        // Predicated region
        $region81: #{autoencoder_forward.1} parent=79 // pred_check
          %p2114 = pneg %p367
        $region82: #{autoencoder_forward.1} parent=79 // pred_check_branch
          %2116 = sbr.rel (%p2114) target = $region84
        $region83: #{autoencoder_forward.1} parent=79 // pred_region
          %s2118 = ssub.s32 448, 448
          %2119 = vsyncadd %s2110, %s2118
          %s2120 = smul.addr %s29, 7
          %s2121 = smul.addr %s2120, 64
          %s2122 = scalar_lea.hbm %s15, %s2121
          %s2124 = sshll.u32 %s2113, 4
          %s2125 = int_to_ptr.vmem [resolvable:$true] %s2124
          %2127 = dma.vmem_to_hbm [thread:$0]  %s2125, 448, %s2122, %s2110
        $region84: #{autoencoder_forward.1} parent=79 // pred_fallthru
          _
      $region80: #{autoencoder_forward.1} parent=5 // pred_fallthru
        _
      %p2128 = scmp.le.s32.totalorder 2, %s24
      // Predicated region
      $region85: #{autoencoder_forward.1} parent=5 // pred_check
        %p2129 = pneg %p2128
      $region86: #{autoencoder_forward.1} parent=5 // pred_check_branch
        %2131 = sbr.rel (%p2129) target = $region88
      $region87: #{autoencoder_forward.1} parent=5 // pred_region
        %s2132 = ssub.s32 %s24, 2
        // Predicated region
        $region89: #{autoencoder_forward.1} parent=87 // pred_check
          %p2133 = pneg %p373
        $region90: #{autoencoder_forward.1} parent=87 // pred_check_branch
          %2135 = sbr.rel (%p2133) target = $region92
        $region91: #{autoencoder_forward.1} parent=87 // pred_region
          %s2136 = sand.u32 %s358, 1
          %s2137 = scalar_lea.sflag [#allocation3], %s2136
          %s2138 = sand.u32 %s358, 1
          %s2139 = smul.addr %s2138, 28
          %s2140 = scalar_lea.vmem [#allocation2], %s2139
          %2141 = dma.done %s2137, 448
        $region92: #{autoencoder_forward.1} parent=87 // pred_fallthru
          _
      $region88: #{autoencoder_forward.1} parent=5 // pred_fallthru
        _
    $region6: #{autoencoder_forward.1} parent=1 // loop_footer
      %s28 = sadd.s32 1, %s24
    $region7: #{autoencoder_forward.1} parent=1 // loop_footer_branch
      %23 = sbr.rel target = $region3
    $region8: #{autoencoder_forward.1} parent=1 // loop_exit
      _
    %2142 = vsyncpa [#allocation3], 1
    %s2143 = scalar_lea.sflag [#allocation3], 1
    %2144 = vsyncpa %s2143, 1

</llo_original>
